<compile_context>
chip_gen: v6e
topology: v6e:2x2x1
jax: 0.10.0
libtpu: 0.0.40
codegen_flags: <defaults>
</compile_context>

<pallas_src>
import math

import jax
import jax.numpy as jnp
from jax.experimental import pallas as pl
from jax.experimental.pallas import tpu as pltpu


# --------------------------------------------------------------------------
# Pallas kernel: one transformer encoder layer + BERT-style tanh pooler.
# Only the CLS (representation_token_pos = 0) path is computed after the K/V
# projection, because the module output is the pooled CLS vector only.
# --------------------------------------------------------------------------
def _encoder_pooler_kernel(
    x_ref, bias_ref,
    wq_ref, wkv_ref, wo_ref, w1_ref, w2_ref, wp_ref, vec_ref,
    out_ref,
):
    bt, s, h = x_ref.shape
    f = w1_ref.shape[1]

    def mm(a, w):                          # bf16 x bf16 -> f32 accumulation on MXU
        return jnp.dot(a.astype(jnp.bfloat16), w,
                       preferred_element_type=jnp.float32)

    def vec(row, width):                   # packed (1, width) f32 bias/gamma/beta
        return vec_ref[row:row + 1, 0:width]

    def layernorm(y, g, b):                # two-pass mean/var, all f32
        mu = jnp.mean(y, axis=-1, keepdims=True)
        d = y - mu
        var = jnp.mean(d * d, axis=-1, keepdims=True)
        return d * jax.lax.rsqrt(var + 1e-12) * g + b

    x = x_ref[...]                         # (Bt, S, H) f32 (residual stays f32)
    x2 = x.reshape(bt * s, h)              # fold batch into the MXU M dimension
    x_cls = x[:, 0, :]                     # (Bt, H) CLS rows

    # ---- fused K|V projection over every token (one MXU pass, N = 2H) ----
    kv = mm(x2, wkv_ref[...])                                       # (Bt*S, 2H) f32
    k3 = (kv[:, 0:h] + vec(1, h)).astype(jnp.bfloat16).reshape(bt, s, h)
    v3 = (kv[:, h:2 * h] + vec(2, h)).astype(jnp.bfloat16).reshape(bt, s, h)

    # ---- Q for the CLS query rows only; 1/sqrt(H) pre-folded into wq/bq ----
    q = (mm(x_cls, wq_ref[...]) + vec(0, h)).astype(jnp.bfloat16)    # (Bt, H)
    q3 = q.reshape(bt, 1, h)

    # ---- attention of the single CLS query against all keys ----
    scores = jnp.einsum("bqd,bkd->bqk", q3, k3,
                        preferred_element_type=jnp.float32)          # (Bt, 1, S)
    scores = scores + bias_ref[...]                                  # (Bt, 1, S)
    scores = scores - jnp.max(scores, axis=-1, keepdims=True)
    p = jnp.exp(scores)
    p = p * pl.reciprocal(jnp.sum(p, axis=-1, keepdims=True), approx=True)
    attn = jnp.einsum("bqk,bkd->bqd", p.astype(jnp.bfloat16), v3,
                      preferred_element_type=jnp.float32)            # (Bt, 1, H)
    attn = attn.reshape(bt, h)

    # ---- post-attention path on CLS rows only (output is pooled CLS) ----
    h1 = layernorm(x_cls + mm(attn, wo_ref[...]) + vec(3, h), vec(4, h), vec(5, h))
    ff = mm(h1, w1_ref[...]) + vec(6, f)
    # TODO(synk): reference BERT/LXMERT uses the exact erf GELU; tanh approx kept.
    ff = jax.nn.gelu(ff, approximate=True)
    ff = mm(ff, w2_ref[...]) + vec(7, h)
    h2 = layernorm(h1 + ff, vec(8, h), vec(9, h))

    # ---- pooler: dense + tanh on the CLS representation ----
    pooled = jnp.tanh(mm(h2, wp_ref[...]) + vec(10, h))
    out_ref[...] = pooled.astype(out_ref.dtype)                      # (Bt, H)


# --------------------------------------------------------------------------
# Wrapper-side packing of kernel parameters.
# --------------------------------------------------------------------------
def _pack_kernel_params(p, H, F):
    """Fold softmax scale into wq/bq, fuse K|V, pack the 11 bias/LN vectors."""
    scale = 1.0 / math.sqrt(float(H))
    wq = (p["wq"].astype(jnp.float32) * scale).astype(jnp.bfloat16)
    wkv = jnp.concatenate([p["wk"], p["wv"]], axis=1).astype(jnp.bfloat16)
    wo = p["wo"].astype(jnp.bfloat16)
    w1 = p["w1"].astype(jnp.bfloat16)
    w2 = p["w2"].astype(jnp.bfloat16)
    wp = p["wp"].astype(jnp.bfloat16)

    W = max(H, F)

    def row(v):
        v = v.reshape(-1).astype(jnp.float32)
        return jnp.pad(v, (0, W - v.shape[0]))

    vecs = jnp.stack([
        row(p["bq"] * scale), row(p["bk"]), row(p["bv"]), row(p["bo"]),
        row(p["g1"]), row(p["b1"]), row(p["c1"]), row(p["c2"]),
        row(p["g2"]), row(p["b2"]), row(p["bp"]),
    ])                                                                # (11, max(H,F)) f32
    return wq, wkv, wo, w1, w2, wp, vecs


def _default_batch_tile(B, S):
    # Single grid step by default: v5e/v6e have one TensorCore, so extra grid
    # steps are pure per-step overhead, and a single step maximizes the MXU M
    # dimension (Bt*S rows).  Only split into two "parallel" steps (v7x
    # megacore) when each half still feeds a full 256-row MXU tile and keeps
    # an 8-sublane-aligned output block.
    if B % 2 == 0 and (B // 2) % 8 == 0 and (B // 2) * S >= 256:
        return B // 2
    return B


def encode_pooled(x, attn_mask, params, *, batch_tile=None):
    """Run the Pallas encoder+pooler over a batch of embedded sequences."""
    B, S, H = x.shape
    F = params["w1"].shape[1]
    if batch_tile is None:
        batch_tile = _default_batch_tile(B, S)
    assert B % batch_tile == 0
    grid = B // batch_tile

    bias = ((attn_mask.astype(jnp.float32) - 1.0) * 1e9).reshape(B, 1, S)
    x = x.astype(jnp.float32)
    weights = _pack_kernel_params(params, H, F)

    in_specs = [
        pl.BlockSpec((batch_tile, S, H), lambda b: (b, 0, 0)),   # hidden states
        pl.BlockSpec((batch_tile, 1, S), lambda b: (b, 0, 0)),   # attention bias
    ]
    for w in weights:
        in_specs.append(pl.BlockSpec(w.shape, lambda b, n=w.ndim: (0,) * n))

    return pl.pallas_call(
        _encoder_pooler_kernel,
        out_shape=jax.ShapeDtypeStruct((B, H), jnp.float32),
        grid=(grid,),
        in_specs=in_specs,
        out_specs=pl.BlockSpec((batch_tile, H), lambda b: (b, 0)),
        compiler_params=pltpu.CompilerParams(
            dimension_semantics=("arbitrary",) if grid == 1 else ("parallel",),
            # Plenty for these toy shapes; re-derive for H~768/F~3072/S~512
            # (v7x has 64 MiB VMEM total).
            vmem_limit_bytes=32 * 1024 * 1024,
        ),
    )(x, bias, *weights)


# --------------------------------------------------------------------------
# Plain-JAX glue: embeddings, visual projection, parameter init.
# --------------------------------------------------------------------------
def _embed_text(ids, segments, p):
    L = ids.shape[1]
    return p["tok_emb"][ids] + p["seg_emb"][segments] + p["pos_emb"][:L][None, :, :]


def init_encoder_params(key, *, H, F, vocab, max_pos, visual=False, Dv=None):
    keys = jax.random.split(key, 32)
    s = 0.02
    p = {
        "tok_emb": s * jax.random.normal(keys[0], (vocab, H), jnp.float32),
        "seg_emb": s * jax.random.normal(keys[1], (2, H), jnp.float32),
        "pos_emb": s * jax.random.normal(keys[2], (max_pos, H), jnp.float32),
        "wq": s * jax.random.normal(keys[3], (H, H), jnp.float32),
        "bq": jnp.zeros((1, H), jnp.float32),
        "wk": s * jax.random.normal(keys[4], (H, H), jnp.float32),
        "bk": jnp.zeros((1, H), jnp.float32),
        "wv": s * jax.random.normal(keys[5], (H, H), jnp.float32),
        "bv": jnp.zeros((1, H), jnp.float32),
        "wo": s * jax.random.normal(keys[6], (H, H), jnp.float32),
        "bo": jnp.zeros((1, H), jnp.float32),
        "g1": jnp.ones((1, H), jnp.float32),
        "b1": jnp.zeros((1, H), jnp.float32),
        "w1": s * jax.random.normal(keys[7], (H, F), jnp.float32),
        "c1": jnp.zeros((1, F), jnp.float32),
        "w2": s * jax.random.normal(keys[8], (F, H), jnp.float32),
        "c2": jnp.zeros((1, H), jnp.float32),
        "g2": jnp.ones((1, H), jnp.float32),
        "b2": jnp.zeros((1, H), jnp.float32),
        "wp": s * jax.random.normal(keys[9], (H, H), jnp.float32),
        "bp": jnp.zeros((1, H), jnp.float32),
    }
    if visual:
        p["wvf"] = s * jax.random.normal(keys[10], (Dv, H), jnp.float32)
        p["wvp"] = s * jax.random.normal(keys[11], (4, H), jnp.float32)
        p["bvis"] = jnp.zeros((H,), jnp.float32)
    return p


def biencoder_forward(q_params, ctx_params,
                      question_ids, question_segments, question_attn_mask,
                      context_ids, ctx_segments, ctx_attn_mask,
                      visual_feats, visual_pos):
    """Equivalent of BiEncoder.forward: returns (q_pooled_out, ctx_pooled_out)."""
    # ---- question (LXMERT-style) encoder: text + visual tokens ----
    q_text = _embed_text(question_ids, question_segments, q_params)        # (B, Lq, H)
    vis = (jnp.einsum("bnd,dh->bnh", visual_feats, q_params["wvf"])
           + jnp.einsum("bnp,ph->bnh", visual_pos, q_params["wvp"])
           + q_params["bvis"])                                             # (B, Nv, H)
    qx = jnp.concatenate([q_text, vis], axis=1)                            # (B, Lq+Nv, H)
    vis_mask = jnp.ones((question_attn_mask.shape[0], vis.shape[1]),
                        question_attn_mask.dtype)
    q_mask = jnp.concatenate([question_attn_mask, vis_mask], axis=1)
    q_pooled = encode_pooled(qx, q_mask, q_params)

    # ---- context (text-only) encoder ----
    cx = _embed_text(context_ids, ctx_segments, ctx_params)                # (Bc, Lc, H)
    ctx_pooled = encode_pooled(cx, ctx_attn_mask, ctx_params)
    return q_pooled, ctx_pooled


# TODO(synk): load_images() / create_biencoder_input*() / load_state() are
# host-side file IO & tokenization with no kernel equivalent; replaced by a
# synthetic in-memory visual feature bank below.

if __name__ == "__main__":
    key = jax.random.PRNGKey(0)
    kq, kc, kd = jax.random.split(key, 3)

    # Small shapes consistent with the forward pass.
    B_Q = 2        # questions
    B_CTX = 4      # contexts (positives + negatives, flattened)
    L_Q = 8        # question tokens
    L_CTX = 16     # context tokens
    NV = 8         # visual regions per image
    DV = 256       # visual feature dim
    H = 128        # hidden dim
    F = 256        # FFN dim
    VOCAB = 64
    MAX_POS = 32

    q_params = init_encoder_params(kq, H=H, F=F, vocab=VOCAB, max_pos=MAX_POS,
                                   visual=True, Dv=DV)
    ctx_params = init_encoder_params(kc, H=H, F=F, vocab=VOCAB, max_pos=MAX_POS)

    dk = jax.random.split(kd, 6)
    question_ids = jax.random.randint(dk[0], (B_Q, L_Q), 0, VOCAB, jnp.int32)
    question_segments = jnp.zeros((B_Q, L_Q), jnp.int32)
    question_attn_mask = jnp.ones((B_Q, L_Q), jnp.int32)
    context_ids = jax.random.randint(dk[1], (B_CTX, L_CTX), 0, VOCAB, jnp.int32)
    ctx_segments = jnp.zeros((B_CTX, L_CTX), jnp.int32)
    ctx_attn_mask = jnp.ones((B_CTX, L_CTX), jnp.int32)

    # Synthetic visual feature "bank" (stands in for self.visual_feats/visual_pos).
    n_imgs = 3
    feat_bank = jax.random.normal(dk[2], (n_imgs, NV, DV), jnp.float32)
    pos_bank = jax.random.uniform(dk[3], (n_imgs, NV, 4), jnp.float32)
    img_ids = jnp.array([0, 1], jnp.int32)            # one image id per question
    visual_feats = feat_bank[img_ids]                 # (B_Q, NV, DV)
    visual_pos = pos_bank[img_ids]                    # (B_Q, NV, 4)

    q_pooled, ctx_pooled = biencoder_forward(
        q_params, ctx_params,
        question_ids, question_segments, question_attn_mask,
        context_ids, ctx_segments, ctx_attn_mask,
        visual_feats, visual_pos,
    )
    jax.block_until_ready((q_pooled, ctx_pooled))
    assert q_pooled.shape == (B_Q, H) and ctx_pooled.shape == (B_CTX, H)
    assert bool(jnp.all(jnp.isfinite(q_pooled))) and bool(jnp.all(jnp.isfinite(ctx_pooled)))
    print("KERNEL_OK")
</pallas_src>

<mosaic_0001>
module attributes {stable_mosaic.version = 11 : i64} {
  func.func @_encoder_pooler_kernel(%arg0: i32, %arg1: memref<2x16x128xf32, #tpu.memory_space<vmem>>, %arg2: memref<2x1x16xf32, #tpu.memory_space<vmem>>, %arg3: memref<128x128xbf16, #tpu.memory_space<vmem>>, %arg4: memref<128x256xbf16, #tpu.memory_space<vmem>>, %arg5: memref<128x128xbf16, #tpu.memory_space<vmem>>, %arg6: memref<128x256xbf16, #tpu.memory_space<vmem>>, %arg7: memref<256x128xbf16, #tpu.memory_space<vmem>>, %arg8: memref<128x128xbf16, #tpu.memory_space<vmem>>, %arg9: memref<11x256xf32, #tpu.memory_space<vmem>>, %arg10: memref<2x128xf32, #tpu.memory_space<vmem>>) attributes {dimension_semantics = [#tpu.dimension_semantics<arbitrary>], iteration_bounds = array<i64: 1>, scalar_prefetch = 0 : i64, scratch_operands = 0 : i64, tpu.core_type = #tpu.core_type<tc>, window_params = [{transform_indices = @transform_0, window_bounds = array<i64: 2, 16, 128>}, {transform_indices = @transform_1, window_bounds = array<i64: 2, 1, 16>}, {pipeline_mode = #tpu.pipeline_mode<synchronous>, transform_indices = @transform_2, window_bounds = array<i64: 128, 128>}, {pipeline_mode = #tpu.pipeline_mode<synchronous>, transform_indices = @transform_3, window_bounds = array<i64: 128, 256>}, {pipeline_mode = #tpu.pipeline_mode<synchronous>, transform_indices = @transform_4, window_bounds = array<i64: 128, 128>}, {pipeline_mode = #tpu.pipeline_mode<synchronous>, transform_indices = @transform_5, window_bounds = array<i64: 128, 256>}, {pipeline_mode = #tpu.pipeline_mode<synchronous>, transform_indices = @transform_6, window_bounds = array<i64: 256, 128>}, {pipeline_mode = #tpu.pipeline_mode<synchronous>, transform_indices = @transform_7, window_bounds = array<i64: 128, 128>}, {pipeline_mode = #tpu.pipeline_mode<synchronous>, transform_indices = @transform_8, window_bounds = array<i64: 11, 256>}, {transform_indices = @transform_9, window_bounds = array<i64: 2, 128>}]} {
    %c0 = arith.constant 0 : index
    %c0_0 = arith.constant 0 : index
    %c0_1 = arith.constant 0 : index
    %0 = vector.load %arg1[%c0, %c0_0, %c0_1] : memref<2x16x128xf32, #tpu.memory_space<vmem>>, vector<2x16x128xf32>
    %1 = vector.shape_cast %0 : vector<2x16x128xf32> to vector<32x128xf32>
    %2 = vector.extract_strided_slice %0 {offsets = [0, 0, 0], sizes = [2, 1, 128], strides = [1, 1, 1]} : vector<2x16x128xf32> to vector<2x1x128xf32>
    %3 = vector.shape_cast %2 : vector<2x1x128xf32> to vector<2x128xf32>
    %c0_2 = arith.constant 0 : index
    %c0_3 = arith.constant 0 : index
    %4 = vector.load %arg4[%c0_2, %c0_3] : memref<128x256xbf16, #tpu.memory_space<vmem>>, vector<128x256xbf16>
    %5 = arith.truncf %1 : vector<32x128xf32> to vector<32x128xbf16>
    %cst = arith.constant dense<0.000000e+00> : vector<32x256xf32>
    %6 = tpu.matmul %5, %4, %cst {dimension_numbers = #tpu.dot_dimension_numbers<[1], [0], [0], [1], [0, 0, 1, 1], [], []>} : vector<32x128xbf16>, vector<128x256xbf16>, vector<32x256xf32> -> vector<32x256xf32>
    %7 = vector.extract_strided_slice %6 {offsets = [0, 0], sizes = [32, 128], strides = [1, 1]} : vector<32x256xf32> to vector<32x128xf32>
    %c1 = arith.constant 1 : index
    %c0_4 = arith.constant 0 : index
    %8 = vector.load %arg9[%c1, %c0_4] : memref<11x256xf32, #tpu.memory_space<vmem>>, vector<1x128xf32>
    %9 = vector.broadcast %8 : vector<1x128xf32> to vector<32x128xf32>
    %10 = arith.addf %7, %9 : vector<32x128xf32>
    %11 = arith.truncf %10 : vector<32x128xf32> to vector<32x128xbf16>
    %12 = vector.shape_cast %11 : vector<32x128xbf16> to vector<2x16x128xbf16>
    %13 = vector.extract_strided_slice %6 {offsets = [0, 128], sizes = [32, 128], strides = [1, 1]} : vector<32x256xf32> to vector<32x128xf32>
    %c2 = arith.constant 2 : index
    %c0_5 = arith.constant 0 : index
    %14 = vector.load %arg9[%c2, %c0_5] : memref<11x256xf32, #tpu.memory_space<vmem>>, vector<1x128xf32>
    %15 = vector.broadcast %14 : vector<1x128xf32> to vector<32x128xf32>
    %16 = arith.addf %13, %15 : vector<32x128xf32>
    %17 = arith.truncf %16 : vector<32x128xf32> to vector<32x128xbf16>
    %18 = vector.shape_cast %17 : vector<32x128xbf16> to vector<2x16x128xbf16>
    %c0_6 = arith.constant 0 : index
    %c0_7 = arith.constant 0 : index
    %19 = vector.load %arg3[%c0_6, %c0_7] : memref<128x128xbf16, #tpu.memory_space<vmem>>, vector<128x128xbf16>
    %20 = arith.truncf %3 : vector<2x128xf32> to vector<2x128xbf16>
    %cst_8 = arith.constant dense<0.000000e+00> : vector<2x128xf32>
    %21 = tpu.matmul %20, %19, %cst_8 {dimension_numbers = #tpu.dot_dimension_numbers<[1], [0], [0], [1], [0, 0, 1, 1], [], []>} : vector<2x128xbf16>, vector<128x128xbf16>, vector<2x128xf32> -> vector<2x128xf32>
    %c0_9 = arith.constant 0 : index
    %c0_10 = arith.constant 0 : index
    %22 = vector.load %arg9[%c0_9, %c0_10] : memref<11x256xf32, #tpu.memory_space<vmem>>, vector<1x128xf32>
    %23 = vector.broadcast %22 : vector<1x128xf32> to vector<2x128xf32>
    %24 = arith.addf %21, %23 : vector<2x128xf32>
    %25 = arith.truncf %24 : vector<2x128xf32> to vector<2x128xbf16>
    %26 = vector.shape_cast %25 : vector<2x128xbf16> to vector<2x1x128xbf16>
    "tpu.trace_start"() <{level = 10 : i32, message = "bqd,bkd->bqk"}> : () -> ()
    %cst_11 = arith.constant dense<0.000000e+00> : vector<2x1x16xf32>
    %27 = tpu.matmul %26, %12, %cst_11 {dimension_numbers = #tpu.dot_dimension_numbers<[2], [2], [1], [1], [0, 0, 0, 1, 1, 1], [0], [0]>} : vector<2x1x128xbf16>, vector<2x16x128xbf16>, vector<2x1x16xf32> -> vector<2x1x16xf32>
    "tpu.trace_stop"() : () -> ()
    %c0_12 = arith.constant 0 : index
    %c0_13 = arith.constant 0 : index
    %c0_14 = arith.constant 0 : index
    %28 = vector.load %arg2[%c0_12, %c0_13, %c0_14] : memref<2x1x16xf32, #tpu.memory_space<vmem>>, vector<2x1x16xf32>
    %29 = arith.addf %27, %28 : vector<2x1x16xf32>
    %cst_15 = arith.constant dense<0xFF800000> : vector<2x1xf32>
    %30 = vector.multi_reduction <maximumf>, %29, %cst_15 [2] : vector<2x1x16xf32> to vector<2x1xf32>
    %31 = vector.shape_cast %30 : vector<2x1xf32> to vector<2x1x1xf32>
    %32 = vector.broadcast %31 : vector<2x1x1xf32> to vector<2x1x16xf32>
    %33 = arith.subf %29, %32 : vector<2x1x16xf32>
    %34 = math.exp %33 : vector<2x1x16xf32>
    %cst_16 = arith.constant dense<0.000000e+00> : vector<2x1xf32>
    %35 = vector.multi_reduction <add>, %34, %cst_16 [2] : vector<2x1x16xf32> to vector<2x1xf32>
    %36 = vector.shape_cast %35 : vector<2x1xf32> to vector<2x1x1xf32>
    %37 = tpu.reciprocal %36 {approx = true} : vector<2x1x1xf32> -> vector<2x1x1xf32>
    %38 = vector.broadcast %37 : vector<2x1x1xf32> to vector<2x1x16xf32>
    %39 = arith.mulf %34, %38 : vector<2x1x16xf32>
    %40 = arith.truncf %39 : vector<2x1x16xf32> to vector<2x1x16xbf16>
    "tpu.trace_start"() <{level = 10 : i32, message = "bqk,bkd->bqd"}> : () -> ()
    %cst_17 = arith.constant dense<0.000000e+00> : vector<2x1x128xf32>
    %41 = tpu.matmul %40, %18, %cst_17 {dimension_numbers = #tpu.dot_dimension_numbers<[2], [1], [1], [2], [0, 0, 0, 1, 1, 2], [0], [0]>} : vector<2x1x16xbf16>, vector<2x16x128xbf16>, vector<2x1x128xf32> -> vector<2x1x128xf32>
    "tpu.trace_stop"() : () -> ()
    %42 = vector.shape_cast %41 : vector<2x1x128xf32> to vector<2x128xf32>
    %c0_18 = arith.constant 0 : index
    %c0_19 = arith.constant 0 : index
    %43 = vector.load %arg5[%c0_18, %c0_19] : memref<128x128xbf16, #tpu.memory_space<vmem>>, vector<128x128xbf16>
    %44 = arith.truncf %42 : vector<2x128xf32> to vector<2x128xbf16>
    %cst_20 = arith.constant dense<0.000000e+00> : vector<2x128xf32>
    %45 = tpu.matmul %44, %43, %cst_20 {dimension_numbers = #tpu.dot_dimension_numbers<[1], [0], [0], [1], [0, 0, 1, 1], [], []>} : vector<2x128xbf16>, vector<128x128xbf16>, vector<2x128xf32> -> vector<2x128xf32>
    %46 = arith.addf %3, %45 : vector<2x128xf32>
    %c3 = arith.constant 3 : index
    %c0_21 = arith.constant 0 : index
    %47 = vector.load %arg9[%c3, %c0_21] : memref<11x256xf32, #tpu.memory_space<vmem>>, vector<1x128xf32>
    %48 = vector.broadcast %47 : vector<1x128xf32> to vector<2x128xf32>
    %49 = arith.addf %46, %48 : vector<2x128xf32>
    %c4 = arith.constant 4 : index
    %c0_22 = arith.constant 0 : index
    %50 = vector.load %arg9[%c4, %c0_22] : memref<11x256xf32, #tpu.memory_space<vmem>>, vector<1x128xf32>
    %c5 = arith.constant 5 : index
    %c0_23 = arith.constant 0 : index
    %51 = vector.load %arg9[%c5, %c0_23] : memref<11x256xf32, #tpu.memory_space<vmem>>, vector<1x128xf32>
    %cst_24 = arith.constant dense<0.000000e+00> : vector<2xf32>
    %52 = vector.multi_reduction <add>, %49, %cst_24 [1] : vector<2x128xf32> to vector<2xf32>
    %53 = vector.shape_cast %52 : vector<2xf32> to vector<2x1xf32>
    %cst_25 = arith.constant 1.280000e+02 : f32
    %54 = vector.broadcast %cst_25 : f32 to vector<2x1xf32>
    %55 = arith.divf %53, %54 : vector<2x1xf32>
    %56 = vector.broadcast %55 : vector<2x1xf32> to vector<2x128xf32>
    %57 = arith.subf %49, %56 : vector<2x128xf32>
    %58 = arith.mulf %57, %57 : vector<2x128xf32>
    %cst_26 = arith.constant dense<0.000000e+00> : vector<2xf32>
    %59 = vector.multi_reduction <add>, %58, %cst_26 [1] : vector<2x128xf32> to vector<2xf32>
    %60 = vector.shape_cast %59 : vector<2xf32> to vector<2x1xf32>
    %cst_27 = arith.constant 1.280000e+02 : f32
    %61 = vector.broadcast %cst_27 : f32 to vector<2x1xf32>
    %62 = arith.divf %60, %61 : vector<2x1xf32>
    %cst_28 = arith.constant 9.99999996E-13 : f32
    %63 = vector.broadcast %cst_28 : f32 to vector<2x1xf32>
    %64 = arith.addf %62, %63 : vector<2x1xf32>
    %65 = math.rsqrt %64 : vector<2x1xf32>
    %66 = vector.broadcast %65 : vector<2x1xf32> to vector<2x128xf32>
    %67 = arith.mulf %57, %66 : vector<2x128xf32>
    %68 = vector.broadcast %50 : vector<1x128xf32> to vector<2x128xf32>
    %69 = arith.mulf %67, %68 : vector<2x128xf32>
    %70 = vector.broadcast %51 : vector<1x128xf32> to vector<2x128xf32>
    %71 = arith.addf %69, %70 : vector<2x128xf32>
    %c0_29 = arith.constant 0 : index
    %c0_30 = arith.constant 0 : index
    %72 = vector.load %arg6[%c0_29, %c0_30] : memref<128x256xbf16, #tpu.memory_space<vmem>>, vector<128x256xbf16>
    %73 = arith.truncf %71 : vector<2x128xf32> to vector<2x128xbf16>
    %cst_31 = arith.constant dense<0.000000e+00> : vector<2x256xf32>
    %74 = tpu.matmul %73, %72, %cst_31 {dimension_numbers = #tpu.dot_dimension_numbers<[1], [0], [0], [1], [0, 0, 1, 1], [], []>} : vector<2x128xbf16>, vector<128x256xbf16>, vector<2x256xf32> -> vector<2x256xf32>
    %c6 = arith.constant 6 : index
    %c0_32 = arith.constant 0 : index
    %75 = vector.load %arg9[%c6, %c0_32] : memref<11x256xf32, #tpu.memory_space<vmem>>, vector<1x256xf32>
    %76 = vector.broadcast %75 : vector<1x256xf32> to vector<2x256xf32>
    %77 = arith.addf %74, %76 : vector<2x256xf32>
    %78 = arith.mulf %77, %77 : vector<2x256xf32>
    %79 = arith.mulf %77, %78 : vector<2x256xf32>
    %cst_33 = arith.constant 4.471500e-02 : f32
    %80 = vector.broadcast %cst_33 : f32 to vector<2x256xf32>
    %81 = arith.mulf %80, %79 : vector<2x256xf32>
    %82 = arith.addf %77, %81 : vector<2x256xf32>
    %cst_34 = arith.constant 0.797884583 : f32
    %83 = vector.broadcast %cst_34 : f32 to vector<2x256xf32>
    %84 = arith.mulf %83, %82 : vector<2x256xf32>
    %85 = math.tanh %84 : vector<2x256xf32>
    %cst_35 = arith.constant 1.000000e+00 : f32
    %86 = vector.broadcast %cst_35 : f32 to vector<2x256xf32>
    %87 = arith.addf %86, %85 : vector<2x256xf32>
    %cst_36 = arith.constant 5.000000e-01 : f32
    %88 = vector.broadcast %cst_36 : f32 to vector<2x256xf32>
    %89 = arith.mulf %88, %87 : vector<2x256xf32>
    %90 = arith.mulf %77, %89 : vector<2x256xf32>
    %c0_37 = arith.constant 0 : index
    %c0_38 = arith.constant 0 : index
    %91 = vector.load %arg7[%c0_37, %c0_38] : memref<256x128xbf16, #tpu.memory_space<vmem>>, vector<256x128xbf16>
    %92 = arith.truncf %90 : vector<2x256xf32> to vector<2x256xbf16>
    %cst_39 = arith.constant dense<0.000000e+00> : vector<2x128xf32>
    %93 = tpu.matmul %92, %91, %cst_39 {dimension_numbers = #tpu.dot_dimension_numbers<[1], [0], [0], [1], [0, 0, 1, 1], [], []>} : vector<2x256xbf16>, vector<256x128xbf16>, vector<2x128xf32> -> vector<2x128xf32>
    %c7 = arith.constant 7 : index
    %c0_40 = arith.constant 0 : index
    %94 = vector.load %arg9[%c7, %c0_40] : memref<11x256xf32, #tpu.memory_space<vmem>>, vector<1x128xf32>
    %95 = vector.broadcast %94 : vector<1x128xf32> to vector<2x128xf32>
    %96 = arith.addf %93, %95 : vector<2x128xf32>
    %97 = arith.addf %71, %96 : vector<2x128xf32>
    %c8 = arith.constant 8 : index
    %c0_41 = arith.constant 0 : index
    %98 = vector.load %arg9[%c8, %c0_41] : memref<11x256xf32, #tpu.memory_space<vmem>>, vector<1x128xf32>
    %c9 = arith.constant 9 : index
    %c0_42 = arith.constant 0 : index
    %99 = vector.load %arg9[%c9, %c0_42] : memref<11x256xf32, #tpu.memory_space<vmem>>, vector<1x128xf32>
    %cst_43 = arith.constant dense<0.000000e+00> : vector<2xf32>
    %100 = vector.multi_reduction <add>, %97, %cst_43 [1] : vector<2x128xf32> to vector<2xf32>
    %101 = vector.shape_cast %100 : vector<2xf32> to vector<2x1xf32>
    %cst_44 = arith.constant 1.280000e+02 : f32
    %102 = vector.broadcast %cst_44 : f32 to vector<2x1xf32>
    %103 = arith.divf %101, %102 : vector<2x1xf32>
    %104 = vector.broadcast %103 : vector<2x1xf32> to vector<2x128xf32>
    %105 = arith.subf %97, %104 : vector<2x128xf32>
    %106 = arith.mulf %105, %105 : vector<2x128xf32>
    %cst_45 = arith.constant dense<0.000000e+00> : vector<2xf32>
    %107 = vector.multi_reduction <add>, %106, %cst_45 [1] : vector<2x128xf32> to vector<2xf32>
    %108 = vector.shape_cast %107 : vector<2xf32> to vector<2x1xf32>
    %cst_46 = arith.constant 1.280000e+02 : f32
    %109 = vector.broadcast %cst_46 : f32 to vector<2x1xf32>
    %110 = arith.divf %108, %109 : vector<2x1xf32>
    %cst_47 = arith.constant 9.99999996E-13 : f32
    %111 = vector.broadcast %cst_47 : f32 to vector<2x1xf32>
    %112 = arith.addf %110, %111 : vector<2x1xf32>
    %113 = math.rsqrt %112 : vector<2x1xf32>
    %114 = vector.broadcast %113 : vector<2x1xf32> to vector<2x128xf32>
    %115 = arith.mulf %105, %114 : vector<2x128xf32>
    %116 = vector.broadcast %98 : vector<1x128xf32> to vector<2x128xf32>
    %117 = arith.mulf %115, %116 : vector<2x128xf32>
    %118 = vector.broadcast %99 : vector<1x128xf32> to vector<2x128xf32>
    %119 = arith.addf %117, %118 : vector<2x128xf32>
    %c0_48 = arith.constant 0 : index
    %c0_49 = arith.constant 0 : index
    %120 = vector.load %arg8[%c0_48, %c0_49] : memref<128x128xbf16, #tpu.memory_space<vmem>>, vector<128x128xbf16>
    %121 = arith.truncf %119 : vector<2x128xf32> to vector<2x128xbf16>
    %cst_50 = arith.constant dense<0.000000e+00> : vector<2x128xf32>
    %122 = tpu.matmul %121, %120, %cst_50 {dimension_numbers = #tpu.dot_dimension_numbers<[1], [0], [0], [1], [0, 0, 1, 1], [], []>} : vector<2x128xbf16>, vector<128x128xbf16>, vector<2x128xf32> -> vector<2x128xf32>
    %c10 = arith.constant 10 : index
    %c0_51 = arith.constant 0 : index
    %123 = vector.load %arg9[%c10, %c0_51] : memref<11x256xf32, #tpu.memory_space<vmem>>, vector<1x128xf32>
    %124 = vector.broadcast %123 : vector<1x128xf32> to vector<2x128xf32>
    %125 = arith.addf %122, %124 : vector<2x128xf32>
    %126 = math.tanh %125 : vector<2x128xf32>
    %c0_52 = arith.constant 0 : index
    %c0_53 = arith.constant 0 : index
    %127 = vector.load %arg10[%c0_52, %c0_53] : memref<2x128xf32, #tpu.memory_space<vmem>>, vector<2x128xf32>
    tpu.vector_store %arg10[%c0_52, %c0_53], %126 {strides = array<i32>} : memref<2x128xf32, #tpu.memory_space<vmem>>, vector<2x128xf32>,
    return
  }
  func.func @transform_0(%arg0: i32) -> (i32, i32, i32) {
    %c0_i32 = arith.constant 0 : i32
    %c0_i32_0 = arith.constant 0 : i32
    %c0_i32_1 = arith.constant 0 : i32
    return %arg0, %c0_i32, %c0_i32_0 : i32, i32, i32
  }
  func.func @transform_1(%arg0: i32) -> (i32, i32, i32) {
    %c0_i32 = arith.constant 0 : i32
    %c0_i32_0 = arith.constant 0 : i32
    %c0_i32_1 = arith.constant 0 : i32
    return %arg0, %c0_i32, %c0_i32_0 : i32, i32, i32
  }
  func.func @transform_2(%arg0: i32) -> (i32, i32) {
    %c0_i32 = arith.constant 0 : i32
    %c0_i32_0 = arith.constant 0 : i32
    %c0_i32_1 = arith.constant 0 : i32
    return %c0_i32, %c0_i32_0 : i32, i32
  }
  func.func @transform_3(%arg0: i32) -> (i32, i32) {
    %c0_i32 = arith.constant 0 : i32
    %c0_i32_0 = arith.constant 0 : i32
    %c0_i32_1 = arith.constant 0 : i32
    return %c0_i32, %c0_i32_0 : i32, i32
  }
  func.func @transform_4(%arg0: i32) -> (i32, i32) {
    %c0_i32 = arith.constant 0 : i32
    %c0_i32_0 = arith.constant 0 : i32
    %c0_i32_1 = arith.constant 0 : i32
    return %c0_i32, %c0_i32_0 : i32, i32
  }
  func.func @transform_5(%arg0: i32) -> (i32, i32) {
    %c0_i32 = arith.constant 0 : i32
    %c0_i32_0 = arith.constant 0 : i32
    %c0_i32_1 = arith.constant 0 : i32
    return %c0_i32, %c0_i32_0 : i32, i32
  }
  func.func @transform_6(%arg0: i32) -> (i32, i32) {
    %c0_i32 = arith.constant 0 : i32
    %c0_i32_0 = arith.constant 0 : i32
    %c0_i32_1 = arith.constant 0 : i32
    return %c0_i32, %c0_i32_0 : i32, i32
  }
  func.func @transform_7(%arg0: i32) -> (i32, i32) {
    %c0_i32 = arith.constant 0 : i32
    %c0_i32_0 = arith.constant 0 : i32
    %c0_i32_1 = arith.constant 0 : i32
    return %c0_i32, %c0_i32_0 : i32, i32
  }
  func.func @transform_8(%arg0: i32) -> (i32, i32) {
    %c0_i32 = arith.constant 0 : i32
    %c0_i32_0 = arith.constant 0 : i32
    %c0_i32_1 = arith.constant 0 : i32
    return %c0_i32, %c0_i32_0 : i32, i32
  }
  func.func @transform_9(%arg0: i32) -> (i32, i32) {
    %c0_i32 = arith.constant 0 : i32
    %c0_i32_0 = arith.constant 0 : i32
    return %arg0, %c0_i32 : i32, i32
  }
}

</mosaic_0001>

<llo_original>
// kernel: tpu_custom_call.1
$region0: #{tpu_custom_call.1}
  #allocation0 [shape = 'u32[]', space=smem, size = 0x4, offset = 0x4, fixed_abs, tag = 'smem constant byte address 0x4 - core index']
  #allocation1 [shape = 'u32[144,128]{1,0:T(1,128)}', space=vmem, size = 0x12000, scoped, tag = 'internal scratch']
  %s0 = inlined_call_operand.hbm [shape: f32[2,16,128], index: 0, kind: input, shape index: {}]
  %s1 = inlined_call_operand.hbm [shape: f32[2,1,16], index: 1, kind: input, shape index: {}]
  %s2 = inlined_call_operand.hbm [shape: bf16[128,128], index: 2, kind: input, shape index: {}]
  %s3 = inlined_call_operand.hbm [shape: bf16[128,256], index: 3, kind: input, shape index: {}]
  %s4 = inlined_call_operand.hbm [shape: bf16[128,128], index: 4, kind: input, shape index: {}]
  %s5 = inlined_call_operand.hbm [shape: bf16[128,256], index: 5, kind: input, shape index: {}]
  %s6 = inlined_call_operand.hbm [shape: bf16[256,128], index: 6, kind: input, shape index: {}]
  %s7 = inlined_call_operand.hbm [shape: bf16[128,128], index: 7, kind: input, shape index: {}]
  %s8 = inlined_call_operand.hbm [shape: f32[11,256], index: 8, kind: input, shape index: {}]
  %s9 = inlined_call_operand.hbm [shape: f32[2,128], index: 9, kind: output, shape index: {}]
  %s10 = sld [smem:[#allocation0]]
  $region82: #{tpu_custom_call.1} parent=0
    _
  %s12 = ssub.s32 1, %s10
  %s13 = scalar_select 0, %s12, %s10
  $region1: #{tpu_custom_call.1} parent=0
    #allocation2 [shape = 'u8[16384]{0}', space=vmem, size = 0x4000, scoped, tag = 'input window, operand 0, single buffered']
    #allocation3 [shape = 's32[1]{0}', space=sflag, size = 0x4, scoped, tag = 'scoped memory for tpu_custom_call.1']
    #allocation4 [shape = 's32[1]{0}', space=sflag, size = 0x4, scoped, tag = 'scoped memory for tpu_custom_call.1']
    #allocation5 [shape = 'u8[1024]{0}', space=vmem, size = 0x400, scoped, tag = 'input window, operand 1, single buffered']
    #allocation6 [shape = 's32[1]{0}', space=sflag, size = 0x4, scoped, tag = 'scoped memory for tpu_custom_call.1']
    #allocation7 [shape = 'u8[32768]{0}', space=vmem, size = 0x8000, scoped, tag = 'input window, operand 2, single buffered']
    #allocation8 [shape = 'u8[65536]{0}', space=vmem, size = 0x10000, scoped, tag = 'input window, operand 3, single buffered']
    #allocation9 [shape = 's32[1]{0}', space=sflag, size = 0x4, scoped, tag = 'scoped memory for tpu_custom_call.1']
    #allocation10 [shape = 'u8[32768]{0}', space=vmem, size = 0x8000, scoped, tag = 'input window, operand 4, single buffered']
    #allocation11 [shape = 'u8[65536]{0}', space=vmem, size = 0x10000, scoped, tag = 'input window, operand 5, single buffered']
    #allocation12 [shape = 's32[1]{0}', space=sflag, size = 0x4, scoped, tag = 'scoped memory for tpu_custom_call.1']
    #allocation13 [shape = 'u8[65536]{0}', space=vmem, size = 0x10000, scoped, tag = 'input window, operand 6, single buffered']
    #allocation14 [shape = 'u8[32768]{0}', space=vmem, size = 0x8000, scoped, tag = 'input window, operand 7, single buffered']
    #allocation15 [shape = 's32[1]{0}', space=sflag, size = 0x4, scoped, tag = 'scoped memory for tpu_custom_call.1']
    #allocation16 [shape = 'u8[16384]{0}', space=vmem, size = 0x4000, scoped, tag = 'input window, operand 8, single buffered']
    #allocation17 [shape = 'u8[1024]{0}', space=vmem, size = 0x400, scoped, tag = 'output window, operand 0, single buffered']
    %14 = vsyncpa [#allocation3], 0
    %15 = vsyncpa [#allocation6], 0
    %16 = vsyncpa [#allocation9], 0
    %17 = vsyncpa [#allocation12], 0
    %18 = vsyncpa [#allocation15], 0
    %19 = vsyncpa [#allocation4], 0
    // Predicated region
    $region2: #{tpu_custom_call.1} parent=1 // pred_check
      _
    $region3: #{tpu_custom_call.1} parent=1 // pred_check_branch
      %21 = sbr.rel (0) target = $region5
    $region4: #{tpu_custom_call.1} parent=1 // pred_region
      %s23 = ssub.s32 512, 512
      %24 = vsyncadd [#allocation3], %s23
      %s25 = sshll.u32 [#allocation2], 4
      %s26 = int_to_ptr.vmem [resolvable:$true] %s25
      %31 = dma.hbm_to_vmem [thread:$0]  %s0, 512, %s26, [#allocation3], 128, 128, 8
    $region5: #{tpu_custom_call.1} parent=1 // pred_fallthru
      _
    // Predicated region
    $region6: #{tpu_custom_call.1} parent=1 // pred_check
      _
    $region7: #{tpu_custom_call.1} parent=1 // pred_check_branch
      %33 = sbr.rel (0) target = $region9
    $region8: #{tpu_custom_call.1} parent=1 // pred_region
      %s35 = ssub.s32 32, 32
      %36 = vsyncadd [#allocation6], %s35
      %s37 = sshll.u32 [#allocation5], 4
      %s38 = int_to_ptr.vmem [resolvable:$true] %s37
      %43 = dma.hbm_to_vmem [thread:$0]  %s1, 32, %s38, [#allocation6], 16, 16, 1
    $region9: #{tpu_custom_call.1} parent=1 // pred_fallthru
      _
    // Predicated region
    $region10: #{tpu_custom_call.1} parent=1 // pred_check
      _
    $region11: #{tpu_custom_call.1} parent=1 // pred_check_branch
      %45 = sbr.rel (0) target = $region13
    $region12: #{tpu_custom_call.1} parent=1 // pred_region
      %s47 = ssub.s32 1024, 1024
      %48 = vsyncadd [#allocation6], %s47
      %s49 = sshll.u32 [#allocation7], 4
      %s50 = int_to_ptr.vmem [resolvable:$true] %s49
      %55 = dma.hbm_to_vmem [thread:$0]  %s2, 1024, %s50, [#allocation6], 64, 64, 4
    $region13: #{tpu_custom_call.1} parent=1 // pred_fallthru
      _
    // Predicated region
    $region14: #{tpu_custom_call.1} parent=1 // pred_check
      _
    $region15: #{tpu_custom_call.1} parent=1 // pred_check_branch
      %57 = sbr.rel (0) target = $region17
    $region16: #{tpu_custom_call.1} parent=1 // pred_region
      %s59 = ssub.s32 2048, 2048
      %60 = vsyncadd [#allocation9], %s59
      %s61 = sshll.u32 [#allocation8], 4
      %s62 = int_to_ptr.vmem [resolvable:$true] %s61
      %67 = dma.hbm_to_vmem [thread:$0]  %s3, 2048, %s62, [#allocation9], 128, 128, 8
    $region17: #{tpu_custom_call.1} parent=1 // pred_fallthru
      _
    // Predicated region
    $region18: #{tpu_custom_call.1} parent=1 // pred_check
      _
    $region19: #{tpu_custom_call.1} parent=1 // pred_check_branch
      %69 = sbr.rel (0) target = $region21
    $region20: #{tpu_custom_call.1} parent=1 // pred_region
      %s71 = ssub.s32 1024, 1024
      %72 = vsyncadd [#allocation9], %s71
      %s73 = sshll.u32 [#allocation10], 4
      %s74 = int_to_ptr.vmem [resolvable:$true] %s73
      %79 = dma.hbm_to_vmem [thread:$0]  %s4, 1024, %s74, [#allocation9], 64, 64, 4
    $region21: #{tpu_custom_call.1} parent=1 // pred_fallthru
      _
    // Predicated region
    $region22: #{tpu_custom_call.1} parent=1 // pred_check
      _
    $region23: #{tpu_custom_call.1} parent=1 // pred_check_branch
      %81 = sbr.rel (0) target = $region25
    $region24: #{tpu_custom_call.1} parent=1 // pred_region
      %s83 = ssub.s32 2048, 2048
      %84 = vsyncadd [#allocation12], %s83
      %s85 = sshll.u32 [#allocation11], 4
      %s86 = int_to_ptr.vmem [resolvable:$true] %s85
      %91 = dma.hbm_to_vmem [thread:$0]  %s5, 2048, %s86, [#allocation12], 128, 128, 8
    $region25: #{tpu_custom_call.1} parent=1 // pred_fallthru
      _
    // Predicated region
    $region26: #{tpu_custom_call.1} parent=1 // pred_check
      _
    $region27: #{tpu_custom_call.1} parent=1 // pred_check_branch
      %93 = sbr.rel (0) target = $region29
    $region28: #{tpu_custom_call.1} parent=1 // pred_region
      %s95 = ssub.s32 2048, 2048
      %96 = vsyncadd [#allocation12], %s95
      %s97 = sshll.u32 [#allocation13], 4
      %s98 = int_to_ptr.vmem [resolvable:$true] %s97
      %103 = dma.hbm_to_vmem [thread:$0]  %s6, 2048, %s98, [#allocation12], 64, 64, 4
    $region29: #{tpu_custom_call.1} parent=1 // pred_fallthru
      _
    // Predicated region
    $region30: #{tpu_custom_call.1} parent=1 // pred_check
      _
    $region31: #{tpu_custom_call.1} parent=1 // pred_check_branch
      %105 = sbr.rel (0) target = $region33
    $region32: #{tpu_custom_call.1} parent=1 // pred_region
      %s107 = ssub.s32 1024, 1024
      %108 = vsyncadd [#allocation15], %s107
      %s109 = sshll.u32 [#allocation14], 4
      %s110 = int_to_ptr.vmem [resolvable:$true] %s109
      %115 = dma.hbm_to_vmem [thread:$0]  %s7, 1024, %s110, [#allocation15], 64, 64, 4
    $region33: #{tpu_custom_call.1} parent=1 // pred_fallthru
      _
    // Predicated region
    $region34: #{tpu_custom_call.1} parent=1 // pred_check
      _
    $region35: #{tpu_custom_call.1} parent=1 // pred_check_branch
      %117 = sbr.rel (0) target = $region37
    $region36: #{tpu_custom_call.1} parent=1 // pred_region
      %s119 = ssub.s32 512, 512
      %120 = vsyncadd [#allocation15], %s119
      %s121 = sshll.u32 [#allocation16], 4
      %s122 = int_to_ptr.vmem [resolvable:$true] %s121
      %127 = dma.hbm_to_vmem [thread:$0]  %s8, 512, %s122, [#allocation15], 256, 256, 16
    $region37: #{tpu_custom_call.1} parent=1 // pred_fallthru
      _
    // Predicated region
    $region38: #{tpu_custom_call.1} parent=1 // pred_check
      _
    $region39: #{tpu_custom_call.1} parent=1 // pred_check_branch
      %129 = sbr.rel (0) target = $region41
    $region40: #{tpu_custom_call.1} parent=1 // pred_region
      %130 = dma.done [#allocation3], 512
    $region41: #{tpu_custom_call.1} parent=1 // pred_fallthru
      _
    // Predicated region
    $region42: #{tpu_custom_call.1} parent=1 // pred_check
      _
    $region43: #{tpu_custom_call.1} parent=1 // pred_check_branch
      %132 = sbr.rel (0) target = $region45
    $region44: #{tpu_custom_call.1} parent=1 // pred_region
      %133 = dma.done [#allocation6], 32
    $region45: #{tpu_custom_call.1} parent=1 // pred_fallthru
      _
    // Predicated region
    $region46: #{tpu_custom_call.1} parent=1 // pred_check
      _
    $region47: #{tpu_custom_call.1} parent=1 // pred_check_branch
      %135 = sbr.rel (0) target = $region49
    $region48: #{tpu_custom_call.1} parent=1 // pred_region
      %136 = dma.done [#allocation6], 1024
    $region49: #{tpu_custom_call.1} parent=1 // pred_fallthru
      _
    // Predicated region
    $region50: #{tpu_custom_call.1} parent=1 // pred_check
      _
    $region51: #{tpu_custom_call.1} parent=1 // pred_check_branch
      %138 = sbr.rel (0) target = $region53
    $region52: #{tpu_custom_call.1} parent=1 // pred_region
      %139 = dma.done [#allocation9], 2048
    $region53: #{tpu_custom_call.1} parent=1 // pred_fallthru
      _
    // Predicated region
    $region54: #{tpu_custom_call.1} parent=1 // pred_check
      _
    $region55: #{tpu_custom_call.1} parent=1 // pred_check_branch
      %141 = sbr.rel (0) target = $region57
    $region56: #{tpu_custom_call.1} parent=1 // pred_region
      %142 = dma.done [#allocation9], 1024
    $region57: #{tpu_custom_call.1} parent=1 // pred_fallthru
      _
    // Predicated region
    $region58: #{tpu_custom_call.1} parent=1 // pred_check
      _
    $region59: #{tpu_custom_call.1} parent=1 // pred_check_branch
      %144 = sbr.rel (0) target = $region61
    $region60: #{tpu_custom_call.1} parent=1 // pred_region
      %145 = dma.done [#allocation12], 2048
    $region61: #{tpu_custom_call.1} parent=1 // pred_fallthru
      _
    // Predicated region
    $region62: #{tpu_custom_call.1} parent=1 // pred_check
      _
    $region63: #{tpu_custom_call.1} parent=1 // pred_check_branch
      %147 = sbr.rel (0) target = $region65
    $region64: #{tpu_custom_call.1} parent=1 // pred_region
      %148 = dma.done [#allocation12], 2048
    $region65: #{tpu_custom_call.1} parent=1 // pred_fallthru
      _
    // Predicated region
    $region66: #{tpu_custom_call.1} parent=1 // pred_check
      _
    $region67: #{tpu_custom_call.1} parent=1 // pred_check_branch
      %150 = sbr.rel (0) target = $region69
    $region68: #{tpu_custom_call.1} parent=1 // pred_region
      %151 = dma.done [#allocation15], 1024
    $region69: #{tpu_custom_call.1} parent=1 // pred_fallthru
      _
    // Predicated region
    $region70: #{tpu_custom_call.1} parent=1 // pred_check
      _
    $region71: #{tpu_custom_call.1} parent=1 // pred_check_branch
      %153 = sbr.rel (0) target = $region73
    $region72: #{tpu_custom_call.1} parent=1 // pred_region
      %154 = dma.done [#allocation15], 512
    $region73: #{tpu_custom_call.1} parent=1 // pred_fallthru
      _
    %v156 = vld [vmem:[#allocation2] sm:$0xff]
    %v157 = vld [vmem:[#allocation2 + $0x8] sm:$0xff]
    %v158 = vld [vmem:[#allocation2 + $0x10] sm:$0xff]
    %v159 = vld [vmem:[#allocation2 + $0x18] sm:$0xff]
    %v160 = vld [vmem:[#allocation8] sm:$0xff]
    %v161 = vld [vmem:[#allocation8 + $0x8] sm:$0xff]
    %v162 = vld [vmem:[#allocation8 + $0x10] sm:$0xff]
    %v163 = vld [vmem:[#allocation8 + $0x18] sm:$0xff]
    %v164 = vld [vmem:[#allocation8 + $0x20] sm:$0xff]
    %v165 = vld [vmem:[#allocation8 + $0x28] sm:$0xff]
    %v166 = vld [vmem:[#allocation8 + $0x30] sm:$0xff]
    %v167 = vld [vmem:[#allocation8 + $0x38] sm:$0xff]
    %v168 = vld [vmem:[#allocation8 + $0x40] sm:$0xff]
    %v169 = vld [vmem:[#allocation8 + $0x48] sm:$0xff]
    %v170 = vld [vmem:[#allocation8 + $0x50] sm:$0xff]
    %v171 = vld [vmem:[#allocation8 + $0x58] sm:$0xff]
    %v172 = vld [vmem:[#allocation8 + $0x60] sm:$0xff]
    %v173 = vld [vmem:[#allocation8 + $0x68] sm:$0xff]
    %v174 = vld [vmem:[#allocation8 + $0x70] sm:$0xff]
    %v175 = vld [vmem:[#allocation8 + $0x78] sm:$0xff]
    %v176 = vpack.c.bf16 %v157, %v156
    %v177 = vpack.c.bf16 %v159, %v158
    %v194 = vunpack.c.l.b16 %v160
    %v195 = vunpack.c.h.b16 %v160
    %v196 = vunpack.c.l.b16 %v161
    %v197 = vunpack.c.h.b16 %v161
    %v198 = vunpack.c.l.b16 %v162
    %v199 = vunpack.c.h.b16 %v162
    %v200 = vunpack.c.l.b16 %v163
    %v201 = vunpack.c.h.b16 %v163
    %v202 = vunpack.c.l.b16 %v164
    %v203 = vunpack.c.h.b16 %v164
    %v204 = vunpack.c.l.b16 %v165
    %v205 = vunpack.c.h.b16 %v165
    %v206 = vunpack.c.l.b16 %v166
    %v207 = vunpack.c.h.b16 %v166
    %v208 = vunpack.c.l.b16 %v167
    %v209 = vunpack.c.h.b16 %v167
    %v210 = vunpack.c.l.b16 %v168
    %v211 = vunpack.c.h.b16 %v168
    %v212 = vunpack.c.l.b16 %v169
    %v213 = vunpack.c.h.b16 %v169
    %v214 = vunpack.c.l.b16 %v170
    %v215 = vunpack.c.h.b16 %v170
    %v216 = vunpack.c.l.b16 %v171
    %v217 = vunpack.c.h.b16 %v171
    %v218 = vunpack.c.l.b16 %v172
    %v219 = vunpack.c.h.b16 %v172
    %v220 = vunpack.c.l.b16 %v173
    %v221 = vunpack.c.h.b16 %v173
    %v222 = vunpack.c.l.b16 %v174
    %v223 = vunpack.c.h.b16 %v174
    %v224 = vunpack.c.l.b16 %v175
    %v225 = vunpack.c.h.b16 %v175
    %v226 = vpack.c.b16 %v196, %v194
    %v227 = vpack.c.b16 %v197, %v195
    %v228 = vpack.c.b16 %v200, %v198
    %v229 = vpack.c.b16 %v201, %v199
    %v230 = vpack.c.b16 %v204, %v202
    %v231 = vpack.c.b16 %v205, %v203
    %v232 = vpack.c.b16 %v208, %v206
    %v233 = vpack.c.b16 %v209, %v207
    %v234 = vpack.c.b16 %v212, %v210
    %v235 = vpack.c.b16 %v213, %v211
    %v236 = vpack.c.b16 %v216, %v214
    %v237 = vpack.c.b16 %v217, %v215
    %v238 = vpack.c.b16 %v220, %v218
    %v239 = vpack.c.b16 %v221, %v219
    %v240 = vpack.c.b16 %v224, %v222
    %v241 = vpack.c.b16 %v225, %v223
    %258 = vmatprep.subr.bf16.mxu0 %v241
    %259 = vmatpush1.bf16.msra.mxu0 %v240
    %260 = vmatprep.subr.bf16.mxu0 %v239
    %261 = vmatpush1.bf16.msra.mxu0 %v238
    %262 = vmatprep.subr.bf16.mxu0 %v237
    %263 = vmatpush1.bf16.msra.mxu0 %v236
    %264 = vmatprep.subr.bf16.mxu0 %v235
    %265 = vmatpush1.bf16.msra.mxu0 %v234
    %266 = vmatprep.subr.bf16.mxu0 %v233
    %267 = vmatpush1.bf16.msra.mxu0 %v232
    %268 = vmatprep.subr.bf16.mxu0 %v231
    %269 = vmatpush1.bf16.msra.mxu0 %v230
    %270 = vmatprep.subr.bf16.mxu0 %v229
    %271 = vmatpush1.bf16.msra.mxu0 %v228
    %272 = vmatprep.subr.bf16.mxu0 %v227
    %273 = vmatpush1.bf16.msra.mxu0 %v226
    %274 = vmatprep.subr.bf16.mxu0 0
    %275 = vmatpush2.bf16.msra.mxu0 0
    %276 = vmatprep.subr.bf16.mxu0 0
    %277 = vmatpush2.bf16.msra.mxu0 0
    %278 = vmatprep.subr.bf16.mxu0 0
    %279 = vmatpush2.bf16.msra.mxu0 0
    %280 = vmatprep.subr.bf16.mxu0 0
    %281 = vmatpush2.bf16.msra.mxu0 0
    %282 = vmatprep.subr.bf16.mxu0 0
    %283 = vmatpush2.bf16.msra.mxu0 0
    %284 = vmatprep.subr.bf16.mxu0 0
    %285 = vmatpush2.bf16.msra.mxu0 0
    %286 = vmatprep.subr.bf16.mxu0 0
    %287 = vmatpush2.bf16.msra.mxu0 0
    %288 = vmatprep.subr.bf16.mxu0 0
    %289 = vmatpush2.bf16.msra.mxu0 0
    %290 = vmatprep.mubr.bf16.mxu0 0
    %291 = vmatmul.mubr.bf16.gmra.mxu0 %v176
    %v292 = vpop.f32.mrf.mxu0
    %v293 = vadd.f32 0.0, %v292
    %v294 = vpop.f32.mrf.mxu0
    %v295 = vadd.f32 0.0, %v294
    %v296 = vpop.f32.mrf.mxu0
    %v297 = vadd.f32 0.0, %v296
    %v298 = vpop.f32.mrf.mxu0
    %v299 = vadd.f32 0.0, %v298
    %300 = vmatprep.mubr.bf16.mxu0 0
    %301 = vmatmul.mubr.bf16.gmra.mxu0 %v177
    %v302 = vpop.f32.mrf.mxu0
    %v303 = vadd.f32 0.0, %v302
    %v304 = vpop.f32.mrf.mxu0
    %v305 = vadd.f32 0.0, %v304
    %v306 = vpop.f32.mrf.mxu0
    %v307 = vadd.f32 0.0, %v306
    %v308 = vpop.f32.mrf.mxu0
    %v309 = vadd.f32 0.0, %v308
    %310 = vdwg.mxu0
    %v311 = vld [vmem:[#allocation16 + $0x1] ss:$0 sm:$0xff]
    %v312 = vadd.f32 %v293, %v311
    %v313 = vadd.f32 %v297, %v311
    %v314 = vadd.f32 %v303, %v311
    %v315 = vadd.f32 %v307, %v311
    %v316 = vpack.c.bf16 %v313, %v312
    %v317 = vpack.c.bf16 %v315, %v314
    %v318 = vld [vmem:[#allocation16 + $0x2] ss:$0 sm:$0xff]
    %v319 = vadd.f32 %v295, %v318
    %v320 = vadd.f32 %v299, %v318
    %v321 = vadd.f32 %v305, %v318
    %v322 = vadd.f32 %v309, %v318
    %v323 = vpack.c.bf16 %v320, %v319
    %v324 = vpack.c.bf16 %v322, %v321
    %v325 = vld [vmem:[#allocation7] sm:$0xf]
    %v326 = vld [vmem:[#allocation7 + $0x4] sm:$0xf]
    %v327 = vld [vmem:[#allocation7 + $0x8] sm:$0xf]
    %v328 = vld [vmem:[#allocation7 + $0xc] sm:$0xf]
    %v329 = vld [vmem:[#allocation7 + $0x10] sm:$0xf]
    %v330 = vld [vmem:[#allocation7 + $0x14] sm:$0xf]
    %v331 = vld [vmem:[#allocation7 + $0x18] sm:$0xf]
    %v332 = vld [vmem:[#allocation7 + $0x1c] sm:$0xf]
    %v333 = vld [vmem:[#allocation7 + $0x20] sm:$0xf]
    %v334 = vld [vmem:[#allocation7 + $0x24] sm:$0xf]
    %v335 = vld [vmem:[#allocation7 + $0x28] sm:$0xf]
    %v336 = vld [vmem:[#allocation7 + $0x2c] sm:$0xf]
    %v337 = vld [vmem:[#allocation7 + $0x30] sm:$0xf]
    %v338 = vld [vmem:[#allocation7 + $0x34] sm:$0xf]
    %v339 = vld [vmem:[#allocation7 + $0x38] sm:$0xf]
    %v340 = vld [vmem:[#allocation7 + $0x3c] sm:$0xf]
    %v341 = vpack.c.bf16 %v156, %v156
    %v342 = vpack.c.bf16 %v158, %v158
    %v343 = vld [vmem:[#allocation16] ss:$0 sm:$0xff]
    %v346 = vunpack.c.l.b16 %v341
    %v347 = vunpack.c.l.b16 %v342
    %v348 = vrot.slane %v347, 7
    %vm349 = vcmask 1041409
    %v350 = vsel %vm349, %v348, %v346
    %v351 = vpack.c.b16 %v350, %v350
    %v369 = vunpack.c.l.b16 %v325
    %v370 = vunpack.c.l.b16 %v326
    %v371 = vunpack.c.l.b16 %v327
    %v372 = vunpack.c.l.b16 %v328
    %v373 = vunpack.c.l.b16 %v329
    %v374 = vunpack.c.l.b16 %v330
    %v375 = vunpack.c.l.b16 %v331
    %v376 = vunpack.c.l.b16 %v332
    %v377 = vunpack.c.l.b16 %v333
    %v378 = vunpack.c.l.b16 %v334
    %v379 = vunpack.c.l.b16 %v335
    %v380 = vunpack.c.l.b16 %v336
    %v381 = vunpack.c.l.b16 %v337
    %v382 = vunpack.c.l.b16 %v338
    %v383 = vunpack.c.l.b16 %v339
    %v384 = vunpack.c.l.b16 %v340
    %v385 = vpack.c.b16 %v370, %v369
    %v386 = vpack.c.b16 %v372, %v371
    %v387 = vpack.c.b16 %v374, %v373
    %v388 = vpack.c.b16 %v376, %v375
    %v389 = vpack.c.b16 %v378, %v377
    %v390 = vpack.c.b16 %v380, %v379
    %v391 = vpack.c.b16 %v382, %v381
    %v392 = vpack.c.b16 %v384, %v383
    %401 = vmatprep.subr.bf16.mxu0 0
    %402 = vmatpush1.bf16.msra.mxu0 %v392
    %403 = vmatprep.subr.bf16.mxu0 0
    %404 = vmatpush1.bf16.msra.mxu0 %v391
    %405 = vmatprep.subr.bf16.mxu0 0
    %406 = vmatpush1.bf16.msra.mxu0 %v390
    %407 = vmatprep.subr.bf16.mxu0 0
    %408 = vmatpush1.bf16.msra.mxu0 %v389
    %409 = vmatprep.subr.bf16.mxu0 0
    %410 = vmatpush1.bf16.msra.mxu0 %v388
    %411 = vmatprep.subr.bf16.mxu0 0
    %412 = vmatpush1.bf16.msra.mxu0 %v387
    %413 = vmatprep.subr.bf16.mxu0 0
    %414 = vmatpush1.bf16.msra.mxu0 %v386
    %415 = vmatprep.subr.bf16.mxu0 0
    %416 = vmatpush1.bf16.msra.mxu0 %v385
    %417 = vmatprep.subr.bf16.mxu0 0
    %418 = vmatpush2.bf16.msra.mxu0 0
    %419 = vmatprep.subr.bf16.mxu0 0
    %420 = vmatpush2.bf16.msra.mxu0 0
    %421 = vmatprep.subr.bf16.mxu0 0
    %422 = vmatpush2.bf16.msra.mxu0 0
    %423 = vmatprep.subr.bf16.mxu0 0
    %424 = vmatpush2.bf16.msra.mxu0 0
    %425 = vmatprep.subr.bf16.mxu0 0
    %426 = vmatpush2.bf16.msra.mxu0 0
    %427 = vmatprep.subr.bf16.mxu0 0
    %428 = vmatpush2.bf16.msra.mxu0 0
    %429 = vmatprep.subr.bf16.mxu0 0
    %430 = vmatpush2.bf16.msra.mxu0 0
    %431 = vmatprep.subr.bf16.mxu0 0
    %432 = vmatpush2.bf16.msra.mxu0 0
    %433 = vmatprep.mubr.bf16.mxu0 0
    %434 = vmatmul.mubr.bf16.gmra.mxu0 %v351
    %v435 = vpop.f32.mrf.mxu0
    %v436 = vadd.f32 %v343, %v435
    %v437 = vpop.f32.mrf.mxu0
    %v438 = vpop.f32.mrf.mxu0
    %v439 = vpop.f32.mrf.mxu0
    %440 = vdwg.mxu0
    %v441 = vpack.c.bf16 %v436, %v436
    %v444 = vunpack.c.l.s4 1966171168
    %v445 = vunpack.c.0.s8 %v444
    %v446 = vlaneseq
    %v447 = vshrl.u32 %v446, 7
    %v448 = vsub.s32 %v445, %v447
    %v449 = vrot.slane %v441, %v448
    %v451 = vunpack.c.l.s4 1966171168
    %v452 = vunpack.c.0.s8 %v451
    %v453 = vlaneseq
    %v454 = vshrl.u32 %v453, 7
    %v455 = vsub.s32 %v452, %v454
    %v456 = vrot.slane %v449, %v455
    %v457 = vunpack.i.l.s16 %v456
    %v458 = vunpack.i.h.s16 %v456
    %v459 = vld [vmem:[#allocation5] sm:$0x1]
    %v460 = vld [vmem:[#allocation5 + $0x1] sm:$0x1]
    %v461 = vpack.i.b16 %v457, %v457
    %v462 = vlaneseq
    %v463 = vshrl.u32 %v462, 7
    %v464 = vsub.s32 0, %v463
    %v465 = vrot.slane %v461, %v464
    %467 = vmatprep.subr.bf16.mxu0 0
    %468 = vmatpush1.bf16.xpose.msra.mxu0 0
    %469 = vmatprep.subr.bf16.mxu0 0
    %470 = vmatpush1.bf16.xpose.msra.mxu0 0
    %471 = vmatprep.subr.bf16.mxu0 0
    %472 = vmatpush1.bf16.xpose.msra.mxu0 0
    %473 = vmatprep.subr.bf16.mxu0 0
    %474 = vmatpush1.bf16.xpose.msra.mxu0 0
    %475 = vmatprep.subr.bf16.mxu0 0
    %476 = vmatpush1.bf16.xpose.msra.mxu0 0
    %477 = vmatprep.subr.bf16.mxu0 0
    %478 = vmatpush1.bf16.xpose.msra.mxu0 0
    %479 = vmatprep.subr.bf16.mxu0 0
    %480 = vmatpush1.bf16.xpose.msra.mxu0 0
    %481 = vmatprep.subr.bf16.mxu0 0
    %482 = vmatpush1.bf16.xpose.msra.mxu0 %v316
    %483 = vmatprep.subr.bf16.mxu0 0
    %484 = vmatpush2.bf16.xpose.msra.mxu0 0
    %485 = vmatprep.subr.bf16.mxu0 0
    %486 = vmatpush2.bf16.xpose.msra.mxu0 0
    %487 = vmatprep.subr.bf16.mxu0 0
    %488 = vmatpush2.bf16.xpose.msra.mxu0 0
    %489 = vmatprep.subr.bf16.mxu0 0
    %490 = vmatpush2.bf16.xpose.msra.mxu0 0
    %491 = vmatprep.subr.bf16.mxu0 0
    %492 = vmatpush2.bf16.xpose.msra.mxu0 0
    %493 = vmatprep.subr.bf16.mxu0 0
    %494 = vmatpush2.bf16.xpose.msra.mxu0 0
    %495 = vmatprep.subr.bf16.mxu0 0
    %496 = vmatpush2.bf16.xpose.msra.mxu0 0
    %497 = vmatprep.subr.bf16.mxu0 0
    %498 = vmatpush2.bf16.xpose.msra.mxu0 0
    %499 = vmatprep.mubr.bf16.mxu0 0
    %500 = vmatmul.mubr.bf16.gmra.mxu0 %v465
    %v501 = vpop.f32.mrf.mxu0
    %v502 = vadd.f32 %v459, %v501
    %v503 = vpop.f32.mrf.mxu0
    %v504 = vpop.f32.mrf.mxu0
    %v505 = vpop.f32.mrf.mxu0
    %506 = vdwg.mxu0
    %v507 = vpack.i.b16 %v458, %v458
    %v508 = vlaneseq
    %v509 = vshrl.u32 %v508, 7
    %v510 = vsub.s32 0, %v509
    %v511 = vrot.slane %v507, %v510
    %513 = vmatprep.subr.bf16.mxu0 0
    %514 = vmatpush1.bf16.xpose.msra.mxu0 0
    %515 = vmatprep.subr.bf16.mxu0 0
    %516 = vmatpush1.bf16.xpose.msra.mxu0 0
    %517 = vmatprep.subr.bf16.mxu0 0
    %518 = vmatpush1.bf16.xpose.msra.mxu0 0
    %519 = vmatprep.subr.bf16.mxu0 0
    %520 = vmatpush1.bf16.xpose.msra.mxu0 0
    %521 = vmatprep.subr.bf16.mxu0 0
    %522 = vmatpush1.bf16.xpose.msra.mxu0 0
    %523 = vmatprep.subr.bf16.mxu0 0
    %524 = vmatpush1.bf16.xpose.msra.mxu0 0
    %525 = vmatprep.subr.bf16.mxu0 0
    %526 = vmatpush1.bf16.xpose.msra.mxu0 0
    %527 = vmatprep.subr.bf16.mxu0 0
    %528 = vmatpush1.bf16.xpose.msra.mxu0 %v317
    %529 = vmatprep.subr.bf16.mxu0 0
    %530 = vmatpush2.bf16.xpose.msra.mxu0 0
    %531 = vmatprep.subr.bf16.mxu0 0
    %532 = vmatpush2.bf16.xpose.msra.mxu0 0
    %533 = vmatprep.subr.bf16.mxu0 0
    %534 = vmatpush2.bf16.xpose.msra.mxu0 0
    %535 = vmatprep.subr.bf16.mxu0 0
    %536 = vmatpush2.bf16.xpose.msra.mxu0 0
    %537 = vmatprep.subr.bf16.mxu0 0
    %538 = vmatpush2.bf16.xpose.msra.mxu0 0
    %539 = vmatprep.subr.bf16.mxu0 0
    %540 = vmatpush2.bf16.xpose.msra.mxu0 0
    %541 = vmatprep.subr.bf16.mxu0 0
    %542 = vmatpush2.bf16.xpose.msra.mxu0 0
    %543 = vmatprep.subr.bf16.mxu0 0
    %544 = vmatpush2.bf16.xpose.msra.mxu0 0
    %545 = vmatprep.mubr.bf16.mxu0 0
    %546 = vmatmul.mubr.bf16.gmra.mxu0 %v511
    %v547 = vpop.f32.mrf.mxu0
    %v548 = vadd.f32 %v460, %v547
    %v549 = vpop.f32.mrf.mxu0
    %v550 = vpop.f32.mrf.mxu0
    %v551 = vpop.f32.mrf.mxu0
    %552 = vdwg.mxu0
    %vm553 = vcmask 122880
    %v554 = vsel %vm553, %v502, -inf
    %555 = vmax.xlane.f32.xlu0 %v554
    %v556 = vpop.xlane.xlu0 %555
    %v557 = vsel %vm553, %v548, -inf
    %558 = vmax.xlane.f32.xlu0 %v557
    %v559 = vpop.xlane.xlu0 %558
    %v560 = vsub.f32 %v502, %v556
    %v561 = vsub.f32 %v548, %v559
    %v562 = vmul.f32 %v560, 1.442695
    %v563 = vpow.pop %v562
    %v564 = vmul.f32 %v561, 1.442695
    %v565 = vpow.pop %v564
    %v566 = vsel %vm553, %v563, 0.0
    %567 = vadd.xlane.f32.xlu0 %v566
    %v568 = vpop.xlane.xlu0 %567
    %v569 = vsel %vm553, %v565, 0.0
    %570 = vadd.xlane.f32.xlu0 %v569
    %v571 = vpop.xlane.xlu0 %570
    %v572 = vrcp.pop %v568
    %v573 = vrcp.pop %v571
    %v574 = vmul.f32 %v563, %v572
    %v575 = vmul.f32 %v565, %v573
    %v576 = vpack.c.bf16 %v574, %v574
    %v577 = vpack.c.bf16 %v575, %v575
    %vm578 = vcmask 130048
    %v580 = vsel %vm578, %v576, 0
    %582 = vmatprep.subr.bf16.mxu0 0
    %583 = vmatpush1.bf16.msra.mxu0 0
    %584 = vmatprep.subr.bf16.mxu0 0
    %585 = vmatpush1.bf16.msra.mxu0 0
    %586 = vmatprep.subr.bf16.mxu0 0
    %587 = vmatpush1.bf16.msra.mxu0 0
    %588 = vmatprep.subr.bf16.mxu0 0
    %589 = vmatpush1.bf16.msra.mxu0 0
    %590 = vmatprep.subr.bf16.mxu0 0
    %591 = vmatpush1.bf16.msra.mxu0 0
    %592 = vmatprep.subr.bf16.mxu0 0
    %593 = vmatpush1.bf16.msra.mxu0 0
    %594 = vmatprep.subr.bf16.mxu0 0
    %595 = vmatpush1.bf16.msra.mxu0 0
    %596 = vmatprep.subr.bf16.mxu0 0
    %597 = vmatpush1.bf16.msra.mxu0 %v323
    %598 = vmatprep.subr.bf16.mxu0 0
    %599 = vmatpush2.bf16.msra.mxu0 0
    %600 = vmatprep.subr.bf16.mxu0 0
    %601 = vmatpush2.bf16.msra.mxu0 0
    %602 = vmatprep.subr.bf16.mxu0 0
    %603 = vmatpush2.bf16.msra.mxu0 0
    %604 = vmatprep.subr.bf16.mxu0 0
    %605 = vmatpush2.bf16.msra.mxu0 0
    %606 = vmatprep.subr.bf16.mxu0 0
    %607 = vmatpush2.bf16.msra.mxu0 0
    %608 = vmatprep.subr.bf16.mxu0 0
    %609 = vmatpush2.bf16.msra.mxu0 0
    %610 = vmatprep.subr.bf16.mxu0 0
    %611 = vmatpush2.bf16.msra.mxu0 0
    %612 = vmatprep.subr.bf16.mxu0 0
    %613 = vmatpush2.bf16.msra.mxu0 0
    %614 = vmatprep.mubr.bf16.mxu0 0
    %615 = vmatmul.mubr.bf16.gmra.mxu0 %v580
    %v616 = vpop.f32.mrf.mxu0
    %v617 = vadd.f32 0.0, %v616
    %v618 = vpop.f32.mrf.mxu0
    %v619 = vpop.f32.mrf.mxu0
    %v620 = vpop.f32.mrf.mxu0
    %621 = vdwg.mxu0
    %v623 = vsel %vm578, %v577, 0
    %625 = vmatprep.subr.bf16.mxu0 0
    %626 = vmatpush1.bf16.msra.mxu0 0
    %627 = vmatprep.subr.bf16.mxu0 0
    %628 = vmatpush1.bf16.msra.mxu0 0
    %629 = vmatprep.subr.bf16.mxu0 0
    %630 = vmatpush1.bf16.msra.mxu0 0
    %631 = vmatprep.subr.bf16.mxu0 0
    %632 = vmatpush1.bf16.msra.mxu0 0
    %633 = vmatprep.subr.bf16.mxu0 0
    %634 = vmatpush1.bf16.msra.mxu0 0
    %635 = vmatprep.subr.bf16.mxu0 0
    %636 = vmatpush1.bf16.msra.mxu0 0
    %637 = vmatprep.subr.bf16.mxu0 0
    %638 = vmatpush1.bf16.msra.mxu0 0
    %639 = vmatprep.subr.bf16.mxu0 0
    %640 = vmatpush1.bf16.msra.mxu0 %v324
    %641 = vmatprep.subr.bf16.mxu0 0
    %642 = vmatpush2.bf16.msra.mxu0 0
    %643 = vmatprep.subr.bf16.mxu0 0
    %644 = vmatpush2.bf16.msra.mxu0 0
    %645 = vmatprep.subr.bf16.mxu0 0
    %646 = vmatpush2.bf16.msra.mxu0 0
    %647 = vmatprep.subr.bf16.mxu0 0
    %648 = vmatpush2.bf16.msra.mxu0 0
    %649 = vmatprep.subr.bf16.mxu0 0
    %650 = vmatpush2.bf16.msra.mxu0 0
    %651 = vmatprep.subr.bf16.mxu0 0
    %652 = vmatpush2.bf16.msra.mxu0 0
    %653 = vmatprep.subr.bf16.mxu0 0
    %654 = vmatpush2.bf16.msra.mxu0 0
    %655 = vmatprep.subr.bf16.mxu0 0
    %656 = vmatpush2.bf16.msra.mxu0 0
    %657 = vmatprep.mubr.bf16.mxu0 0
    %658 = vmatmul.mubr.bf16.gmra.mxu0 %v623
    %v659 = vpop.f32.mrf.mxu0
    %v660 = vadd.f32 0.0, %v659
    %v661 = vpop.f32.mrf.mxu0
    %v662 = vpop.f32.mrf.mxu0
    %v663 = vpop.f32.mrf.mxu0
    %664 = vdwg.mxu0
    %v665 = vld [vmem:[#allocation10] sm:$0xf]
    %v666 = vld [vmem:[#allocation10 + $0x4] sm:$0xf]
    %v667 = vld [vmem:[#allocation10 + $0x8] sm:$0xf]
    %v668 = vld [vmem:[#allocation10 + $0xc] sm:$0xf]
    %v669 = vld [vmem:[#allocation10 + $0x10] sm:$0xf]
    %v670 = vld [vmem:[#allocation10 + $0x14] sm:$0xf]
    %v671 = vld [vmem:[#allocation10 + $0x18] sm:$0xf]
    %v672 = vld [vmem:[#allocation10 + $0x1c] sm:$0xf]
    %v673 = vld [vmem:[#allocation10 + $0x20] sm:$0xf]
    %v674 = vld [vmem:[#allocation10 + $0x24] sm:$0xf]
    %v675 = vld [vmem:[#allocation10 + $0x28] sm:$0xf]
    %v676 = vld [vmem:[#allocation10 + $0x2c] sm:$0xf]
    %v677 = vld [vmem:[#allocation10 + $0x30] sm:$0xf]
    %v678 = vld [vmem:[#allocation10 + $0x34] sm:$0xf]
    %v679 = vld [vmem:[#allocation10 + $0x38] sm:$0xf]
    %v680 = vld [vmem:[#allocation10 + $0x3c] sm:$0xf]
    %v681 = vpack.c.bf16 %v617, %v617
    %v682 = vpack.c.bf16 %v660, %v660
    %v685 = vunpack.c.l.b16 %v681
    %v686 = vunpack.c.l.b16 %v682
    %v687 = vrot.slane %v686, 7
    %v688 = vsel %vm349, %v687, %v685
    %v689 = vpack.c.b16 %v688, %v688
    %v707 = vunpack.c.l.b16 %v665
    %v708 = vunpack.c.l.b16 %v666
    %v709 = vunpack.c.l.b16 %v667
    %v710 = vunpack.c.l.b16 %v668
    %v711 = vunpack.c.l.b16 %v669
    %v712 = vunpack.c.l.b16 %v670
    %v713 = vunpack.c.l.b16 %v671
    %v714 = vunpack.c.l.b16 %v672
    %v715 = vunpack.c.l.b16 %v673
    %v716 = vunpack.c.l.b16 %v674
    %v717 = vunpack.c.l.b16 %v675
    %v718 = vunpack.c.l.b16 %v676
    %v719 = vunpack.c.l.b16 %v677
    %v720 = vunpack.c.l.b16 %v678
    %v721 = vunpack.c.l.b16 %v679
    %v722 = vunpack.c.l.b16 %v680
    %v723 = vpack.c.b16 %v708, %v707
    %v724 = vpack.c.b16 %v710, %v709
    %v725 = vpack.c.b16 %v712, %v711
    %v726 = vpack.c.b16 %v714, %v713
    %v727 = vpack.c.b16 %v716, %v715
    %v728 = vpack.c.b16 %v718, %v717
    %v729 = vpack.c.b16 %v720, %v719
    %v730 = vpack.c.b16 %v722, %v721
    %739 = vmatprep.subr.bf16.mxu0 0
    %740 = vmatpush1.bf16.msra.mxu0 %v730
    %741 = vmatprep.subr.bf16.mxu0 0
    %742 = vmatpush1.bf16.msra.mxu0 %v729
    %743 = vmatprep.subr.bf16.mxu0 0
    %744 = vmatpush1.bf16.msra.mxu0 %v728
    %745 = vmatprep.subr.bf16.mxu0 0
    %746 = vmatpush1.bf16.msra.mxu0 %v727
    %747 = vmatprep.subr.bf16.mxu0 0
    %748 = vmatpush1.bf16.msra.mxu0 %v726
    %749 = vmatprep.subr.bf16.mxu0 0
    %750 = vmatpush1.bf16.msra.mxu0 %v725
    %751 = vmatprep.subr.bf16.mxu0 0
    %752 = vmatpush1.bf16.msra.mxu0 %v724
    %753 = vmatprep.subr.bf16.mxu0 0
    %754 = vmatpush1.bf16.msra.mxu0 %v723
    %755 = vmatprep.subr.bf16.mxu0 0
    %756 = vmatpush2.bf16.msra.mxu0 0
    %757 = vmatprep.subr.bf16.mxu0 0
    %758 = vmatpush2.bf16.msra.mxu0 0
    %759 = vmatprep.subr.bf16.mxu0 0
    %760 = vmatpush2.bf16.msra.mxu0 0
    %761 = vmatprep.subr.bf16.mxu0 0
    %762 = vmatpush2.bf16.msra.mxu0 0
    %763 = vmatprep.subr.bf16.mxu0 0
    %764 = vmatpush2.bf16.msra.mxu0 0
    %765 = vmatprep.subr.bf16.mxu0 0
    %766 = vmatpush2.bf16.msra.mxu0 0
    %767 = vmatprep.subr.bf16.mxu0 0
    %768 = vmatpush2.bf16.msra.mxu0 0
    %769 = vmatprep.subr.bf16.mxu0 0
    %770 = vmatpush2.bf16.msra.mxu0 0
    %771 = vmatprep.mubr.bf16.mxu0 0
    %772 = vmatmul.mubr.bf16.gmra.mxu0 %v689
    %v773 = vpop.f32.mrf.mxu0
    %v774 = vadd.f32 0.0, %v773
    %v775 = vpop.f32.mrf.mxu0
    %v776 = vpop.f32.mrf.mxu0
    %v777 = vpop.f32.mrf.mxu0
    %778 = vdwg.mxu0
    %v780 = vrot.slane %v774, 1
    %v783 = vadd.f32 %v156, %v774
    %v784 = vadd.f32 %v158, %v780
    %v785 = vld [vmem:[#allocation16 + $0x3] ss:$0 sm:$0xff]
    %v786 = vadd.f32 %v783, %v785
    %v787 = vadd.f32 %v784, %v785
    %v788 = vld [vmem:[#allocation16 + $0x4] ss:$0 sm:$0xff]
    %v789 = vld [vmem:[#allocation16 + $0x5] ss:$0 sm:$0xff]
    %v792 = vrot.slane %v787, 7
    %v793 = vsel %vm349, %v792, %v786
    %vm795 = vcmask 1041408
    %v796 = vsel %vm795, %v793, 0.0
    %797 = vadd.xlane.f32.xlu0 %v796
    %v798 = vpop.xlane.xlu0 %797
    %v799 = vrcp.pop 128.0
    %v800 = vmul.f32 %v798, %v799
    %v802 = vrot.slane %v800, 1
    %v805 = vsub.f32 %v786, %v800
    %v806 = vsub.f32 %v787, %v802
    %v807 = vmul.f32 %v805, %v805
    %v808 = vmul.f32 %v806, %v806
    %v811 = vrot.slane %v808, 7
    %v812 = vsel %vm349, %v811, %v807
    %v814 = vsel %vm795, %v812, 0.0
    %815 = vadd.xlane.f32.xlu0 %v814
    %v816 = vpop.xlane.xlu0 %815
    %v817 = vmul.f32 %v816, %v799
    %v818 = vadd.f32 %v817, 1e-12
    %v819 = vrsqrt.pop %v818
    %v821 = vrot.slane %v819, 1
    %v824 = vmul.f32 %v805, %v819
    %v825 = vmul.f32 %v806, %v821
    %v826 = vmul.f32 %v824, %v788
    %v827 = vmul.f32 %v825, %v788
    %v828 = vadd.f32 %v826, %v789
    %v829 = vadd.f32 %v827, %v789
    %v830 = vld [vmem:[#allocation11] sm:$0xff]
    %v831 = vld [vmem:[#allocation11 + $0x8] sm:$0xff]
    %v832 = vld [vmem:[#allocation11 + $0x10] sm:$0xff]
    %v833 = vld [vmem:[#allocation11 + $0x18] sm:$0xff]
    %v834 = vld [vmem:[#allocation11 + $0x20] sm:$0xff]
    %v835 = vld [vmem:[#allocation11 + $0x28] sm:$0xff]
    %v836 = vld [vmem:[#allocation11 + $0x30] sm:$0xff]
    %v837 = vld [vmem:[#allocation11 + $0x38] sm:$0xff]
    %v838 = vld [vmem:[#allocation11 + $0x40] sm:$0xff]
    %v839 = vld [vmem:[#allocation11 + $0x48] sm:$0xff]
    %v840 = vld [vmem:[#allocation11 + $0x50] sm:$0xff]
    %v841 = vld [vmem:[#allocation11 + $0x58] sm:$0xff]
    %v842 = vld [vmem:[#allocation11 + $0x60] sm:$0xff]
    %v843 = vld [vmem:[#allocation11 + $0x68] sm:$0xff]
    %v844 = vld [vmem:[#allocation11 + $0x70] sm:$0xff]
    %v845 = vld [vmem:[#allocation11 + $0x78] sm:$0xff]
    %v846 = vpack.c.bf16 %v828, %v828
    %v847 = vpack.c.bf16 %v829, %v829
    %s848 = scalar_lea.vmem [#allocation16], 6
    %v849 = vld [vmem:[%s848] ss:$8 sm:$0x3]
    %v851 = vlaneseq
    %v852 = vshrl.u32 %v851, 7
    %v853 = vsub.s32 0, %v852
    %v854 = vrot.slane %v849, %v853
    %v855 = vlaneseq
    %v856 = vshrl.u32 %v855, 7
    %v857 = vsub.s32 1, %v856
    %v858 = vrot.slane %v849, %v857
    %v863 = vunpack.c.l.b16 %v846
    %v864 = vunpack.c.l.b16 %v847
    %v865 = vrot.slane %v864, 7
    %v866 = vsel %vm349, %v865, %v863
    %v867 = vpack.c.b16 %v866, %v866
    %v885 = vunpack.c.l.b16 %v830
    %v886 = vunpack.c.h.b16 %v830
    %v887 = vunpack.c.l.b16 %v831
    %v888 = vunpack.c.h.b16 %v831
    %v889 = vunpack.c.l.b16 %v832
    %v890 = vunpack.c.h.b16 %v832
    %v891 = vunpack.c.l.b16 %v833
    %v892 = vunpack.c.h.b16 %v833
    %v893 = vunpack.c.l.b16 %v834
    %v894 = vunpack.c.h.b16 %v834
    %v895 = vunpack.c.l.b16 %v835
    %v896 = vunpack.c.h.b16 %v835
    %v897 = vunpack.c.l.b16 %v836
    %v898 = vunpack.c.h.b16 %v836
    %v899 = vunpack.c.l.b16 %v837
    %v900 = vunpack.c.h.b16 %v837
    %v901 = vunpack.c.l.b16 %v838
    %v902 = vunpack.c.h.b16 %v838
    %v903 = vunpack.c.l.b16 %v839
    %v904 = vunpack.c.h.b16 %v839
    %v905 = vunpack.c.l.b16 %v840
    %v906 = vunpack.c.h.b16 %v840
    %v907 = vunpack.c.l.b16 %v841
    %v908 = vunpack.c.h.b16 %v841
    %v909 = vunpack.c.l.b16 %v842
    %v910 = vunpack.c.h.b16 %v842
    %v911 = vunpack.c.l.b16 %v843
    %v912 = vunpack.c.h.b16 %v843
    %v913 = vunpack.c.l.b16 %v844
    %v914 = vunpack.c.h.b16 %v844
    %v915 = vunpack.c.l.b16 %v845
    %v916 = vunpack.c.h.b16 %v845
    %v917 = vpack.c.b16 %v887, %v885
    %v918 = vpack.c.b16 %v888, %v886
    %v919 = vpack.c.b16 %v891, %v889
    %v920 = vpack.c.b16 %v892, %v890
    %v921 = vpack.c.b16 %v895, %v893
    %v922 = vpack.c.b16 %v896, %v894
    %v923 = vpack.c.b16 %v899, %v897
    %v924 = vpack.c.b16 %v900, %v898
    %v925 = vpack.c.b16 %v903, %v901
    %v926 = vpack.c.b16 %v904, %v902
    %v927 = vpack.c.b16 %v907, %v905
    %v928 = vpack.c.b16 %v908, %v906
    %v929 = vpack.c.b16 %v911, %v909
    %v930 = vpack.c.b16 %v912, %v910
    %v931 = vpack.c.b16 %v915, %v913
    %v932 = vpack.c.b16 %v916, %v914
    %949 = vmatprep.subr.bf16.mxu0 %v932
    %950 = vmatpush1.bf16.msra.mxu0 %v931
    %951 = vmatprep.subr.bf16.mxu0 %v930
    %952 = vmatpush1.bf16.msra.mxu0 %v929
    %953 = vmatprep.subr.bf16.mxu0 %v928
    %954 = vmatpush1.bf16.msra.mxu0 %v927
    %955 = vmatprep.subr.bf16.mxu0 %v926
    %956 = vmatpush1.bf16.msra.mxu0 %v925
    %957 = vmatprep.subr.bf16.mxu0 %v924
    %958 = vmatpush1.bf16.msra.mxu0 %v923
    %959 = vmatprep.subr.bf16.mxu0 %v922
    %960 = vmatpush1.bf16.msra.mxu0 %v921
    %961 = vmatprep.subr.bf16.mxu0 %v920
    %962 = vmatpush1.bf16.msra.mxu0 %v919
    %963 = vmatprep.subr.bf16.mxu0 %v918
    %964 = vmatpush1.bf16.msra.mxu0 %v917
    %965 = vmatprep.subr.bf16.mxu0 0
    %966 = vmatpush2.bf16.msra.mxu0 0
    %967 = vmatprep.subr.bf16.mxu0 0
    %968 = vmatpush2.bf16.msra.mxu0 0
    %969 = vmatprep.subr.bf16.mxu0 0
    %970 = vmatpush2.bf16.msra.mxu0 0
    %971 = vmatprep.subr.bf16.mxu0 0
    %972 = vmatpush2.bf16.msra.mxu0 0
    %973 = vmatprep.subr.bf16.mxu0 0
    %974 = vmatpush2.bf16.msra.mxu0 0
    %975 = vmatprep.subr.bf16.mxu0 0
    %976 = vmatpush2.bf16.msra.mxu0 0
    %977 = vmatprep.subr.bf16.mxu0 0
    %978 = vmatpush2.bf16.msra.mxu0 0
    %979 = vmatprep.subr.bf16.mxu0 0
    %980 = vmatpush2.bf16.msra.mxu0 0
    %981 = vmatprep.mubr.bf16.mxu0 0
    %982 = vmatmul.mubr.bf16.gmra.mxu0 %v867
    %v983 = vpop.f32.mrf.mxu0
    %v984 = vadd.f32 %v854, %v983
    %v985 = vpop.f32.mrf.mxu0
    %v986 = vadd.f32 %v858, %v985
    %v987 = vpop.f32.mrf.mxu0
    %v988 = vpop.f32.mrf.mxu0
    %989 = vdwg.mxu0
    %v990 = vmul.f32 %v984, %v984
    %v991 = vmul.f32 %v986, %v986
    %v992 = vmul.f32 %v984, %v990
    %v993 = vmul.f32 %v986, %v991
    %v994 = vmul.f32 %v992, 0.044715
    %v995 = vmul.f32 %v993, 0.044715
    %v996 = vadd.f32 %v984, %v994
    %v997 = vadd.f32 %v986, %v995
    %v998 = vmul.f32 %v996, 0.7978846
    %v999 = vmul.f32 %v997, 0.7978846
    %v1000 = vtanh.pop %v998
    %v1001 = vtanh.pop %v999
    %v1002 = vadd.f32 %v1000, 1.0
    %v1003 = vadd.f32 %v1001, 1.0
    %v1004 = vmul.f32 %v1002, 0.5
    %v1005 = vmul.f32 %v1003, 0.5
    %v1006 = vmul.f32 %v984, %v1004
    %v1007 = vmul.f32 %v986, %v1005
    %v1008 = vld [vmem:[#allocation13] sm:$0xf]
    %v1009 = vld [vmem:[#allocation13 + $0x4] sm:$0xf]
    %v1010 = vld [vmem:[#allocation13 + $0x8] sm:$0xf]
    %v1011 = vld [vmem:[#allocation13 + $0xc] sm:$0xf]
    %v1012 = vld [vmem:[#allocation13 + $0x10] sm:$0xf]
    %v1013 = vld [vmem:[#allocation13 + $0x14] sm:$0xf]
    %v1014 = vld [vmem:[#allocation13 + $0x18] sm:$0xf]
    %v1015 = vld [vmem:[#allocation13 + $0x1c] sm:$0xf]
    %v1016 = vld [vmem:[#allocation13 + $0x20] sm:$0xf]
    %v1017 = vld [vmem:[#allocation13 + $0x24] sm:$0xf]
    %v1018 = vld [vmem:[#allocation13 + $0x28] sm:$0xf]
    %v1019 = vld [vmem:[#allocation13 + $0x2c] sm:$0xf]
    %v1020 = vld [vmem:[#allocation13 + $0x30] sm:$0xf]
    %v1021 = vld [vmem:[#allocation13 + $0x34] sm:$0xf]
    %v1022 = vld [vmem:[#allocation13 + $0x38] sm:$0xf]
    %v1023 = vld [vmem:[#allocation13 + $0x3c] sm:$0xf]
    %v1024 = vld [vmem:[#allocation13 + $0x40] sm:$0xf]
    %v1025 = vld [vmem:[#allocation13 + $0x44] sm:$0xf]
    %v1026 = vld [vmem:[#allocation13 + $0x48] sm:$0xf]
    %v1027 = vld [vmem:[#allocation13 + $0x4c] sm:$0xf]
    %v1028 = vld [vmem:[#allocation13 + $0x50] sm:$0xf]
    %v1029 = vld [vmem:[#allocation13 + $0x54] sm:$0xf]
    %v1030 = vld [vmem:[#allocation13 + $0x58] sm:$0xf]
    %v1031 = vld [vmem:[#allocation13 + $0x5c] sm:$0xf]
    %v1032 = vld [vmem:[#allocation13 + $0x60] sm:$0xf]
    %v1033 = vld [vmem:[#allocation13 + $0x64] sm:$0xf]
    %v1034 = vld [vmem:[#allocation13 + $0x68] sm:$0xf]
    %v1035 = vld [vmem:[#allocation13 + $0x6c] sm:$0xf]
    %v1036 = vld [vmem:[#allocation13 + $0x70] sm:$0xf]
    %v1037 = vld [vmem:[#allocation13 + $0x74] sm:$0xf]
    %v1038 = vld [vmem:[#allocation13 + $0x78] sm:$0xf]
    %v1039 = vld [vmem:[#allocation13 + $0x7c] sm:$0xf]
    %v1040 = vpack.c.bf16 %v1006, %v1006
    %v1041 = vpack.c.bf16 %v1007, %v1007
    %v1042 = vld [vmem:[#allocation16 + $0x7] ss:$0 sm:$0xff]
    %v1075 = vunpack.c.l.b16 %v1008
    %v1076 = vunpack.c.l.b16 %v1009
    %v1077 = vunpack.c.l.b16 %v1010
    %v1078 = vunpack.c.l.b16 %v1011
    %v1079 = vunpack.c.l.b16 %v1012
    %v1080 = vunpack.c.l.b16 %v1013
    %v1081 = vunpack.c.l.b16 %v1014
    %v1082 = vunpack.c.l.b16 %v1015
    %v1083 = vunpack.c.l.b16 %v1016
    %v1084 = vunpack.c.l.b16 %v1017
    %v1085 = vunpack.c.l.b16 %v1018
    %v1086 = vunpack.c.l.b16 %v1019
    %v1087 = vunpack.c.l.b16 %v1020
    %v1088 = vunpack.c.l.b16 %v1021
    %v1089 = vunpack.c.l.b16 %v1022
    %v1090 = vunpack.c.l.b16 %v1023
    %v1091 = vunpack.c.l.b16 %v1024
    %v1092 = vunpack.c.l.b16 %v1025
    %v1093 = vunpack.c.l.b16 %v1026
    %v1094 = vunpack.c.l.b16 %v1027
    %v1095 = vunpack.c.l.b16 %v1028
    %v1096 = vunpack.c.l.b16 %v1029
    %v1097 = vunpack.c.l.b16 %v1030
    %v1098 = vunpack.c.l.b16 %v1031
    %v1099 = vunpack.c.l.b16 %v1032
    %v1100 = vunpack.c.l.b16 %v1033
    %v1101 = vunpack.c.l.b16 %v1034
    %v1102 = vunpack.c.l.b16 %v1035
    %v1103 = vunpack.c.l.b16 %v1036
    %v1104 = vunpack.c.l.b16 %v1037
    %v1105 = vunpack.c.l.b16 %v1038
    %v1106 = vunpack.c.l.b16 %v1039
    %v1107 = vpack.c.b16 %v1076, %v1075
    %v1108 = vpack.c.b16 %v1078, %v1077
    %v1109 = vpack.c.b16 %v1080, %v1079
    %v1110 = vpack.c.b16 %v1082, %v1081
    %v1111 = vpack.c.b16 %v1084, %v1083
    %v1112 = vpack.c.b16 %v1086, %v1085
    %v1113 = vpack.c.b16 %v1088, %v1087
    %v1114 = vpack.c.b16 %v1090, %v1089
    %v1115 = vpack.c.b16 %v1092, %v1091
    %v1116 = vpack.c.b16 %v1094, %v1093
    %v1117 = vpack.c.b16 %v1096, %v1095
    %v1118 = vpack.c.b16 %v1098, %v1097
    %v1119 = vpack.c.b16 %v1100, %v1099
    %v1120 = vpack.c.b16 %v1102, %v1101
    %v1121 = vpack.c.b16 %v1104, %v1103
    %v1122 = vpack.c.b16 %v1106, %v1105
    %1139 = vmatprep.subr.bf16.mxu0 0
    %1140 = vmatpush1.bf16.msra.mxu0 %v1114
    %1141 = vmatprep.subr.bf16.mxu0 0
    %1142 = vmatpush1.bf16.msra.mxu0 %v1113
    %1143 = vmatprep.subr.bf16.mxu0 0
    %1144 = vmatpush1.bf16.msra.mxu0 %v1112
    %1145 = vmatprep.subr.bf16.mxu0 0
    %1146 = vmatpush1.bf16.msra.mxu0 %v1111
    %1147 = vmatprep.subr.bf16.mxu0 0
    %1148 = vmatpush1.bf16.msra.mxu0 %v1110
    %1149 = vmatprep.subr.bf16.mxu0 0
    %1150 = vmatpush1.bf16.msra.mxu0 %v1109
    %1151 = vmatprep.subr.bf16.mxu0 0
    %1152 = vmatpush1.bf16.msra.mxu0 %v1108
    %1153 = vmatprep.subr.bf16.mxu0 0
    %1154 = vmatpush1.bf16.msra.mxu0 %v1107
    %1155 = vmatprep.subr.bf16.mxu0 0
    %1156 = vmatpush2.bf16.msra.mxu0 %v1122
    %1157 = vmatprep.subr.bf16.mxu0 0
    %1158 = vmatpush2.bf16.msra.mxu0 %v1121
    %1159 = vmatprep.subr.bf16.mxu0 0
    %1160 = vmatpush2.bf16.msra.mxu0 %v1120
    %1161 = vmatprep.subr.bf16.mxu0 0
    %1162 = vmatpush2.bf16.msra.mxu0 %v1119
    %1163 = vmatprep.subr.bf16.mxu0 0
    %1164 = vmatpush2.bf16.msra.mxu0 %v1118
    %1165 = vmatprep.subr.bf16.mxu0 0
    %1166 = vmatpush2.bf16.msra.mxu0 %v1117
    %1167 = vmatprep.subr.bf16.mxu0 0
    %1168 = vmatpush2.bf16.msra.mxu0 %v1116
    %1169 = vmatprep.subr.bf16.mxu0 0
    %1170 = vmatpush2.bf16.msra.mxu0 %v1115
    %1171 = vmatprep.mubr.bf16.mxu0 %v1041
    %1172 = vmatmul.mubr.bf16.gmra.mxu0 %v1040
    %v1173 = vpop.f32.mrf.mxu0
    %v1174 = vadd.f32 %v1042, %v1173
    %v1175 = vpop.f32.mrf.mxu0
    %v1176 = vpop.f32.mrf.mxu0
    %v1177 = vpop.f32.mrf.mxu0
    %1178 = vdwg.mxu0
    %v1180 = vrot.slane %v1174, 1
    %v1183 = vadd.f32 %v828, %v1174
    %v1184 = vadd.f32 %v829, %v1180
    %v1185 = vld [vmem:[#allocation16 + $0x10] ss:$0 sm:$0xff]
    %v1186 = vld [vmem:[#allocation16 + $0x11] ss:$0 sm:$0xff]
    %v1189 = vrot.slane %v1184, 7
    %v1190 = vsel %vm349, %v1189, %v1183
    %v1192 = vsel %vm795, %v1190, 0.0
    %1193 = vadd.xlane.f32.xlu0 %v1192
    %v1194 = vpop.xlane.xlu0 %1193
    %v1195 = vmul.f32 %v1194, %v799
    %v1197 = vrot.slane %v1195, 1
    %v1200 = vsub.f32 %v1183, %v1195
    %v1201 = vsub.f32 %v1184, %v1197
    %v1202 = vmul.f32 %v1200, %v1200
    %v1203 = vmul.f32 %v1201, %v1201
    %v1206 = vrot.slane %v1203, 7
    %v1207 = vsel %vm349, %v1206, %v1202
    %v1209 = vsel %vm795, %v1207, 0.0
    %1210 = vadd.xlane.f32.xlu0 %v1209
    %v1211 = vpop.xlane.xlu0 %1210
    %v1212 = vmul.f32 %v1211, %v799
    %v1213 = vadd.f32 %v1212, 1e-12
    %v1214 = vrsqrt.pop %v1213
    %v1216 = vrot.slane %v1214, 1
    %v1219 = vmul.f32 %v1200, %v1214
    %v1220 = vmul.f32 %v1201, %v1216
    %v1221 = vmul.f32 %v1219, %v1185
    %v1222 = vmul.f32 %v1220, %v1185
    %v1223 = vadd.f32 %v1221, %v1186
    %v1224 = vadd.f32 %v1222, %v1186
    %v1225 = vld [vmem:[#allocation14] sm:$0xf]
    %v1226 = vld [vmem:[#allocation14 + $0x4] sm:$0xf]
    %v1227 = vld [vmem:[#allocation14 + $0x8] sm:$0xf]
    %v1228 = vld [vmem:[#allocation14 + $0xc] sm:$0xf]
    %v1229 = vld [vmem:[#allocation14 + $0x10] sm:$0xf]
    %v1230 = vld [vmem:[#allocation14 + $0x14] sm:$0xf]
    %v1231 = vld [vmem:[#allocation14 + $0x18] sm:$0xf]
    %v1232 = vld [vmem:[#allocation14 + $0x1c] sm:$0xf]
    %v1233 = vld [vmem:[#allocation14 + $0x20] sm:$0xf]
    %v1234 = vld [vmem:[#allocation14 + $0x24] sm:$0xf]
    %v1235 = vld [vmem:[#allocation14 + $0x28] sm:$0xf]
    %v1236 = vld [vmem:[#allocation14 + $0x2c] sm:$0xf]
    %v1237 = vld [vmem:[#allocation14 + $0x30] sm:$0xf]
    %v1238 = vld [vmem:[#allocation14 + $0x34] sm:$0xf]
    %v1239 = vld [vmem:[#allocation14 + $0x38] sm:$0xf]
    %v1240 = vld [vmem:[#allocation14 + $0x3c] sm:$0xf]
    %v1241 = vpack.c.bf16 %v1223, %v1223
    %v1242 = vpack.c.bf16 %v1224, %v1224
    %v1243 = vld [vmem:[#allocation16 + $0x12] ss:$0 sm:$0xff]
    %v1246 = vunpack.c.l.b16 %v1241
    %v1247 = vunpack.c.l.b16 %v1242
    %v1248 = vrot.slane %v1247, 7
    %v1249 = vsel %vm349, %v1248, %v1246
    %v1250 = vpack.c.b16 %v1249, %v1249
    %v1268 = vunpack.c.l.b16 %v1225
    %v1269 = vunpack.c.l.b16 %v1226
    %v1270 = vunpack.c.l.b16 %v1227
    %v1271 = vunpack.c.l.b16 %v1228
    %v1272 = vunpack.c.l.b16 %v1229
    %v1273 = vunpack.c.l.b16 %v1230
    %v1274 = vunpack.c.l.b16 %v1231
    %v1275 = vunpack.c.l.b16 %v1232
    %v1276 = vunpack.c.l.b16 %v1233
    %v1277 = vunpack.c.l.b16 %v1234
    %v1278 = vunpack.c.l.b16 %v1235
    %v1279 = vunpack.c.l.b16 %v1236
    %v1280 = vunpack.c.l.b16 %v1237
    %v1281 = vunpack.c.l.b16 %v1238
    %v1282 = vunpack.c.l.b16 %v1239
    %v1283 = vunpack.c.l.b16 %v1240
    %v1284 = vpack.c.b16 %v1269, %v1268
    %v1285 = vpack.c.b16 %v1271, %v1270
    %v1286 = vpack.c.b16 %v1273, %v1272
    %v1287 = vpack.c.b16 %v1275, %v1274
    %v1288 = vpack.c.b16 %v1277, %v1276
    %v1289 = vpack.c.b16 %v1279, %v1278
    %v1290 = vpack.c.b16 %v1281, %v1280
    %v1291 = vpack.c.b16 %v1283, %v1282
    %1300 = vmatprep.subr.bf16.mxu0 0
    %1301 = vmatpush1.bf16.msra.mxu0 %v1291
    %1302 = vmatprep.subr.bf16.mxu0 0
    %1303 = vmatpush1.bf16.msra.mxu0 %v1290
    %1304 = vmatprep.subr.bf16.mxu0 0
    %1305 = vmatpush1.bf16.msra.mxu0 %v1289
    %1306 = vmatprep.subr.bf16.mxu0 0
    %1307 = vmatpush1.bf16.msra.mxu0 %v1288
    %1308 = vmatprep.subr.bf16.mxu0 0
    %1309 = vmatpush1.bf16.msra.mxu0 %v1287
    %1310 = vmatprep.subr.bf16.mxu0 0
    %1311 = vmatpush1.bf16.msra.mxu0 %v1286
    %1312 = vmatprep.subr.bf16.mxu0 0
    %1313 = vmatpush1.bf16.msra.mxu0 %v1285
    %1314 = vmatprep.subr.bf16.mxu0 0
    %1315 = vmatpush1.bf16.msra.mxu0 %v1284
    %1316 = vmatprep.subr.bf16.mxu0 0
    %1317 = vmatpush2.bf16.msra.mxu0 0
    %1318 = vmatprep.subr.bf16.mxu0 0
    %1319 = vmatpush2.bf16.msra.mxu0 0
    %1320 = vmatprep.subr.bf16.mxu0 0
    %1321 = vmatpush2.bf16.msra.mxu0 0
    %1322 = vmatprep.subr.bf16.mxu0 0
    %1323 = vmatpush2.bf16.msra.mxu0 0
    %1324 = vmatprep.subr.bf16.mxu0 0
    %1325 = vmatpush2.bf16.msra.mxu0 0
    %1326 = vmatprep.subr.bf16.mxu0 0
    %1327 = vmatpush2.bf16.msra.mxu0 0
    %1328 = vmatprep.subr.bf16.mxu0 0
    %1329 = vmatpush2.bf16.msra.mxu0 0
    %1330 = vmatprep.subr.bf16.mxu0 0
    %1331 = vmatpush2.bf16.msra.mxu0 0
    %1332 = vmatprep.mubr.bf16.mxu0 0
    %1333 = vmatmul.mubr.bf16.gmra.mxu0 %v1250
    %v1334 = vpop.f32.mrf.mxu0
    %v1335 = vadd.f32 %v1243, %v1334
    %v1336 = vpop.f32.mrf.mxu0
    %v1337 = vpop.f32.mrf.mxu0
    %v1338 = vpop.f32.mrf.mxu0
    %1339 = vdwg.mxu0
    %v1340 = vtanh.pop %v1335
    %1341 = vst [vmem:[#allocation17] sm:$0x3] %v1340
    // Predicated region
    $region74: #{tpu_custom_call.1} parent=1 // pred_check
      _
    $region75: #{tpu_custom_call.1} parent=1 // pred_check_branch
      %1343 = sbr.rel (0) target = $region77
    $region76: #{tpu_custom_call.1} parent=1 // pred_region
      %s1345 = ssub.s32 32, 32
      %1346 = vsyncadd [#allocation4], %s1345
      %s1348 = sshll.u32 [#allocation17], 4
      %s1349 = int_to_ptr.vmem [resolvable:$true] %s1348
      %1351 = dma.vmem_to_hbm [thread:$0]  %s1349, 32, %s9, [#allocation4]
    $region77: #{tpu_custom_call.1} parent=1 // pred_fallthru
      _
    // Predicated region
    $region78: #{tpu_custom_call.1} parent=1 // pred_check
      _
    $region79: #{tpu_custom_call.1} parent=1 // pred_check_branch
      %1353 = sbr.rel (0) target = $region81
    $region80: #{tpu_custom_call.1} parent=1 // pred_region
      %1354 = dma.done [#allocation4], 32
    $region81: #{tpu_custom_call.1} parent=1 // pred_fallthru
      _
    %1355 = vsyncpa [#allocation3], 1
    %1356 = vsyncpa [#allocation6], 1
    %1357 = vsyncpa [#allocation9], 1
    %1358 = vsyncpa [#allocation12], 1
    %1359 = vsyncpa [#allocation15], 1
    %1360 = vsyncpa [#allocation4], 1

</llo_original>
